<compile_context>
chip_gen: v5e
topology: v5e:2x2
jax: 0.10.0
libtpu: 0.0.40
codegen_flags: <defaults>
</compile_context>

<pallas_src>
import jax
import jax.numpy as jnp
from jax import lax
from jax.experimental import pallas as pl
from jax.experimental.pallas import tpu as pltpu

# --- model config (matches the PyTorch script) ---
max_seq_len = 8
embedding_dim = 128   # D
head_size = 32        # hs
num_heads = 4         # H


def mha_kernel(x_ref, mask_ref, wqkv_ref, bqkv_ref, wproj_ref, bproj_ref, out_ref):
    # x_ref:     (BT_blk, D)        flattened (batch*seq, feature) rows, whole sequences
    # mask_ref:  (BT_blk, BT_blk)   additive causal bias: 0 where attend, -1e30 elsewhere
    # wqkv_ref:  (D, 3*H*hs)        fused [Q_h0..h3 | K_h0..h3 | V_h0..h3] weights
    # bqkv_ref:  (1, 3*H*hs)
    # wproj_ref: (H*hs, D)
    # bproj_ref: (1, D)
    # out_ref:   (BT_blk, D)
    x = x_ref[...]
    bt = x.shape[0]
    H = num_heads
    hs = head_size
    D = embedding_dim
    inv_sqrt_c = 1.0 / (float(embedding_dim) ** 0.5)   # hoisted; replaces f32 divide

    # One lane-dense MXU matmul for all heads' Q, K and V: (bt,128) @ (128,384).
    qkv = jnp.dot(x, wqkv_ref[...], preferred_element_type=jnp.float32) + bqkv_ref[...]

    bias = mask_ref[...]               # precomputed block-diagonal causal bias

    acc = jnp.zeros((bt, D), jnp.float32)
    for h in range(H):  # static unroll, H = 4
        q_h = qkv[:, h * hs:(h + 1) * hs]
        k_h = qkv[:, H * hs + h * hs:H * hs + (h + 1) * hs]
        v_h = qkv[:, 2 * H * hs + h * hs:2 * H * hs + (h + 1) * hs]

        # q @ k.T over the whole flattened block (cross-sequence entries masked by bias).
        wei = lax.dot_general(q_h, k_h, (((1,), (1,)), ((), ())),
                              preferred_element_type=jnp.float32)
        # torch float `//` == floor division; multiply-by-reciprocal differs only at
        # ulp-level integer boundaries.
        wei = jnp.floor(wei * inv_sqrt_c) + bias

        # Manual, numerically-stable softmax; normalization deferred to the (bt, hs)
        # head output via an approx EUP reciprocal + VALU multiply.
        m = jnp.max(wei, axis=-1, keepdims=True)
        p = jnp.exp(wei - m)
        inv_s = pl.reciprocal(jnp.sum(p, axis=-1, keepdims=True), approx=True)
        # TODO(synk): nn.Dropout(0.1) on the attention weights treated as identity
        # (eval/inference mode).
        head = jnp.dot(p, v_h, preferred_element_type=jnp.float32) * inv_s

        # Accumulate the output projection per head (lane-dense K=32, N=128 matmul);
        # avoids the lane-axis concatenate/relayout of the previous version.
        acc = acc + jnp.dot(head, wproj_ref[h * hs:(h + 1) * hs, :],
                            preferred_element_type=jnp.float32)

    out_ref[...] = acc + bproj_ref[...]


def init_params(key):
    ks = jax.random.split(key, 8)
    s = 0.02

    def n(k, shape):
        return jax.random.normal(k, shape, dtype=jnp.float32) * s

    # Linear weights are stored transposed vs torch (in_features, out_features),
    # so the kernel computes y = x @ W + b directly.
    return dict(
        wq=n(ks[0], (num_heads, embedding_dim, head_size)),
        bq=n(ks[1], (num_heads, head_size)),
        wk=n(ks[2], (num_heads, embedding_dim, head_size)),
        bk=n(ks[3], (num_heads, head_size)),
        wv=n(ks[4], (num_heads, embedding_dim, head_size)),
        bv=n(ks[5], (num_heads, head_size)),
        wproj=n(ks[6], (num_heads * head_size, embedding_dim)),
        bproj=n(ks[7], (embedding_dim,)),
    )


@jax.jit
def mha_forward(x, params):
    B, T, D = x.shape
    H, hs = num_heads, head_size

    # Fuse per-head Q/K/V weights into one (D, 3*H*hs) matrix (cheap one-time XLA ops).
    def flat(w):  # (H, D, hs) -> (D, H*hs), columns ordered by head
        return jnp.transpose(w, (1, 0, 2)).reshape(D, H * hs)

    w_qkv = jnp.concatenate([flat(params['wq']), flat(params['wk']), flat(params['wv'])],
                            axis=1)                                   # (D, 3*H*hs)
    b_qkv = jnp.concatenate([params['bq'].reshape(-1), params['bk'].reshape(-1),
                             params['bv'].reshape(-1)]).reshape(1, 3 * H * hs)
    wproj = params['wproj']                                           # (H*hs, D)
    bproj = params['bproj'].reshape(1, D)

    x2d = x.reshape(B * T, D)
    BT = B * T
    # 128 rows per grid step (16 whole sequences) -> grid=(2,) at B=32, T=8.
    # Do NOT grow BT_BLK: masked-softmax waste scales quadratically in it.
    BT_BLK = 128 if (BT % 128 == 0) else BT
    assert BT_BLK % T == 0
    grid = (BT // BT_BLK,)

    # Precomputed block-diagonal causal bias (constants only -> XLA constant-folds it).
    # Identical for every 128-row block because each block holds whole sequences.
    r = jnp.arange(BT_BLK, dtype=jnp.int32)[:, None]
    c = jnp.arange(BT_BLK, dtype=jnp.int32)[None, :]
    allowed = (c <= r) & (c >= (r // T) * T)
    mask_bias = jnp.where(allowed, 0.0, -1e30).astype(jnp.float32)    # (BT_BLK, BT_BLK)

    out2d = pl.pallas_call(
        mha_kernel,
        out_shape=jax.ShapeDtypeStruct((BT, D), jnp.float32),
        grid_spec=pltpu.PrefetchScalarGridSpec(
            num_scalar_prefetch=0,
            grid=grid,
            in_specs=[
                pl.BlockSpec((BT_BLK, D), lambda i: (i, 0)),
                pl.BlockSpec((BT_BLK, BT_BLK), lambda i: (0, 0)),
                pl.BlockSpec((D, 3 * H * hs), lambda i: (0, 0)),
                pl.BlockSpec((1, 3 * H * hs), lambda i: (0, 0)),
                pl.BlockSpec((H * hs, D), lambda i: (0, 0)),
                pl.BlockSpec((1, D), lambda i: (0, 0)),
            ],
            out_specs=pl.BlockSpec((BT_BLK, D), lambda i: (i, 0)),
        ),
        compiler_params=pltpu.CompilerParams(
            dimension_semantics=("parallel",)),   # shard row blocks across TCs on v7x
    )(x2d, mask_bias, w_qkv, b_qkv, wproj, bproj)
    return out2d.reshape(B, T, D)


if __name__ == "__main__":
    key = jax.random.PRNGKey(0)
    pkey, xkey = jax.random.split(key)
    params = init_params(pkey)

    B = 32  # same batch as the torch script
    X = jax.random.normal(xkey, (B, max_seq_len, embedding_dim), dtype=jnp.float32)

    out = mha_forward(X, params)
    jax.block_until_ready(out)
    assert out.shape == (B, max_seq_len, embedding_dim)
    assert out.dtype == jnp.float32
    print("KERNEL_OK")
</pallas_src>

<mosaic_0001>
module attributes {stable_mosaic.version = 11 : i64} {
  func.func @mha_kernel(%arg0: i32, %arg1: memref<128x128xf32, #tpu.memory_space<vmem>>, %arg2: memref<128x128xf32, #tpu.memory_space<vmem>>, %arg3: memref<128x384xf32, #tpu.memory_space<vmem>>, %arg4: memref<1x384xf32, #tpu.memory_space<vmem>>, %arg5: memref<128x128xf32, #tpu.memory_space<vmem>>, %arg6: memref<1x128xf32, #tpu.memory_space<vmem>>, %arg7: memref<128x128xf32, #tpu.memory_space<vmem>>) attributes {dimension_semantics = [#tpu.dimension_semantics<parallel>], iteration_bounds = array<i64: 2>, scalar_prefetch = 0 : i64, scratch_operands = 0 : i64, tpu.core_type = #tpu.core_type<tc>, window_params = [{transform_indices = @transform_0, window_bounds = array<i64: 128, 128>}, {pipeline_mode = #tpu.pipeline_mode<synchronous>, transform_indices = @transform_1, window_bounds = array<i64: 128, 128>}, {pipeline_mode = #tpu.pipeline_mode<synchronous>, transform_indices = @transform_2, window_bounds = array<i64: 128, 384>}, {pipeline_mode = #tpu.pipeline_mode<synchronous>, transform_indices = @transform_3, window_bounds = array<i64: 1, 384>}, {pipeline_mode = #tpu.pipeline_mode<synchronous>, transform_indices = @transform_4, window_bounds = array<i64: 128, 128>}, {pipeline_mode = #tpu.pipeline_mode<synchronous>, transform_indices = @transform_5, window_bounds = array<i64: 1, 128>}, {transform_indices = @transform_6, window_bounds = array<i64: 128, 128>}]} {
    %c0 = arith.constant 0 : index
    %c0_0 = arith.constant 0 : index
    %0 = vector.load %arg1[%c0, %c0_0] : memref<128x128xf32, #tpu.memory_space<vmem>>, vector<128x128xf32>
    %c0_1 = arith.constant 0 : index
    %c0_2 = arith.constant 0 : index
    %1 = vector.load %arg3[%c0_1, %c0_2] : memref<128x384xf32, #tpu.memory_space<vmem>>, vector<128x384xf32>
    %cst = arith.constant dense<0.000000e+00> : vector<128x384xf32>
    %2 = tpu.matmul %0, %1, %cst {dimension_numbers = #tpu.dot_dimension_numbers<[1], [0], [0], [1], [0, 0, 1, 1], [], []>} : vector<128x128xf32>, vector<128x384xf32>, vector<128x384xf32> -> vector<128x384xf32>
    %c0_3 = arith.constant 0 : index
    %c0_4 = arith.constant 0 : index
    %3 = vector.load %arg4[%c0_3, %c0_4] : memref<1x384xf32, #tpu.memory_space<vmem>>, vector<1x384xf32>
    %4 = vector.broadcast %3 : vector<1x384xf32> to vector<128x384xf32>
    %5 = arith.addf %2, %4 : vector<128x384xf32>
    %c0_5 = arith.constant 0 : index
    %c0_6 = arith.constant 0 : index
    %6 = vector.load %arg2[%c0_5, %c0_6] : memref<128x128xf32, #tpu.memory_space<vmem>>, vector<128x128xf32>
    %cst_7 = arith.constant 0.000000e+00 : f32
    %7 = vector.broadcast %cst_7 : f32 to vector<128x128xf32>
    %8 = vector.extract_strided_slice %5 {offsets = [0, 0], sizes = [128, 32], strides = [1, 1]} : vector<128x384xf32> to vector<128x32xf32>
    %9 = vector.extract_strided_slice %5 {offsets = [0, 128], sizes = [128, 32], strides = [1, 1]} : vector<128x384xf32> to vector<128x32xf32>
    %10 = vector.extract_strided_slice %5 {offsets = [0, 256], sizes = [128, 32], strides = [1, 1]} : vector<128x384xf32> to vector<128x32xf32>
    %cst_8 = arith.constant dense<0.000000e+00> : vector<128x128xf32>
    %11 = tpu.matmul %8, %9, %cst_8 {dimension_numbers = #tpu.dot_dimension_numbers<[1], [1], [0], [0], [0, 0, 1, 0], [], []>} : vector<128x32xf32>, vector<128x32xf32>, vector<128x128xf32> -> vector<128x128xf32>
    %cst_9 = arith.constant 0.0883883461 : f32
    %12 = vector.broadcast %cst_9 : f32 to vector<128x128xf32>
    %13 = arith.mulf %11, %12 : vector<128x128xf32>
    %14 = math.floor %13 : vector<128x128xf32>
    %15 = arith.addf %14, %6 : vector<128x128xf32>
    %cst_10 = arith.constant dense<0xFF800000> : vector<128xf32>
    %16 = vector.multi_reduction <maximumf>, %15, %cst_10 [1] : vector<128x128xf32> to vector<128xf32>
    %17 = vector.shape_cast %16 : vector<128xf32> to vector<128x1xf32>
    %18 = vector.broadcast %17 : vector<128x1xf32> to vector<128x128xf32>
    %19 = arith.subf %15, %18 : vector<128x128xf32>
    %20 = math.exp %19 : vector<128x128xf32>
    %cst_11 = arith.constant dense<0.000000e+00> : vector<128xf32>
    %21 = vector.multi_reduction <add>, %20, %cst_11 [1] : vector<128x128xf32> to vector<128xf32>
    %22 = vector.shape_cast %21 : vector<128xf32> to vector<128x1xf32>
    %23 = tpu.reciprocal %22 {approx = true} : vector<128x1xf32> -> vector<128x1xf32>
    %cst_12 = arith.constant dense<0.000000e+00> : vector<128x32xf32>
    %24 = tpu.matmul %20, %10, %cst_12 {dimension_numbers = #tpu.dot_dimension_numbers<[1], [0], [0], [1], [0, 0, 1, 1], [], []>} : vector<128x128xf32>, vector<128x32xf32>, vector<128x32xf32> -> vector<128x32xf32>
    %25 = vector.broadcast %23 : vector<128x1xf32> to vector<128x32xf32>
    %26 = arith.mulf %24, %25 : vector<128x32xf32>
    %c0_13 = arith.constant 0 : index
    %c0_14 = arith.constant 0 : index
    %27 = vector.load %arg5[%c0_13, %c0_14] : memref<128x128xf32, #tpu.memory_space<vmem>>, vector<32x128xf32>
    %cst_15 = arith.constant dense<0.000000e+00> : vector<128x128xf32>
    %28 = tpu.matmul %26, %27, %cst_15 {dimension_numbers = #tpu.dot_dimension_numbers<[1], [0], [0], [1], [0, 0, 1, 1], [], []>} : vector<128x32xf32>, vector<32x128xf32>, vector<128x128xf32> -> vector<128x128xf32>
    %29 = arith.addf %7, %28 : vector<128x128xf32>
    %30 = vector.extract_strided_slice %5 {offsets = [0, 32], sizes = [128, 32], strides = [1, 1]} : vector<128x384xf32> to vector<128x32xf32>
    %31 = vector.extract_strided_slice %5 {offsets = [0, 160], sizes = [128, 32], strides = [1, 1]} : vector<128x384xf32> to vector<128x32xf32>
    %32 = vector.extract_strided_slice %5 {offsets = [0, 288], sizes = [128, 32], strides = [1, 1]} : vector<128x384xf32> to vector<128x32xf32>
    %cst_16 = arith.constant dense<0.000000e+00> : vector<128x128xf32>
    %33 = tpu.matmul %30, %31, %cst_16 {dimension_numbers = #tpu.dot_dimension_numbers<[1], [1], [0], [0], [0, 0, 1, 0], [], []>} : vector<128x32xf32>, vector<128x32xf32>, vector<128x128xf32> -> vector<128x128xf32>
    %cst_17 = arith.constant 0.0883883461 : f32
    %34 = vector.broadcast %cst_17 : f32 to vector<128x128xf32>
    %35 = arith.mulf %33, %34 : vector<128x128xf32>
    %36 = math.floor %35 : vector<128x128xf32>
    %37 = arith.addf %36, %6 : vector<128x128xf32>
    %cst_18 = arith.constant dense<0xFF800000> : vector<128xf32>
    %38 = vector.multi_reduction <maximumf>, %37, %cst_18 [1] : vector<128x128xf32> to vector<128xf32>
    %39 = vector.shape_cast %38 : vector<128xf32> to vector<128x1xf32>
    %40 = vector.broadcast %39 : vector<128x1xf32> to vector<128x128xf32>
    %41 = arith.subf %37, %40 : vector<128x128xf32>
    %42 = math.exp %41 : vector<128x128xf32>
    %cst_19 = arith.constant dense<0.000000e+00> : vector<128xf32>
    %43 = vector.multi_reduction <add>, %42, %cst_19 [1] : vector<128x128xf32> to vector<128xf32>
    %44 = vector.shape_cast %43 : vector<128xf32> to vector<128x1xf32>
    %45 = tpu.reciprocal %44 {approx = true} : vector<128x1xf32> -> vector<128x1xf32>
    %cst_20 = arith.constant dense<0.000000e+00> : vector<128x32xf32>
    %46 = tpu.matmul %42, %32, %cst_20 {dimension_numbers = #tpu.dot_dimension_numbers<[1], [0], [0], [1], [0, 0, 1, 1], [], []>} : vector<128x128xf32>, vector<128x32xf32>, vector<128x32xf32> -> vector<128x32xf32>
    %47 = vector.broadcast %45 : vector<128x1xf32> to vector<128x32xf32>
    %48 = arith.mulf %46, %47 : vector<128x32xf32>
    %c32 = arith.constant 32 : index
    %c0_21 = arith.constant 0 : index
    %49 = vector.load %arg5[%c32, %c0_21] : memref<128x128xf32, #tpu.memory_space<vmem>>, vector<32x128xf32>
    %cst_22 = arith.constant dense<0.000000e+00> : vector<128x128xf32>
    %50 = tpu.matmul %48, %49, %cst_22 {dimension_numbers = #tpu.dot_dimension_numbers<[1], [0], [0], [1], [0, 0, 1, 1], [], []>} : vector<128x32xf32>, vector<32x128xf32>, vector<128x128xf32> -> vector<128x128xf32>
    %51 = arith.addf %29, %50 : vector<128x128xf32>
    %52 = vector.extract_strided_slice %5 {offsets = [0, 64], sizes = [128, 32], strides = [1, 1]} : vector<128x384xf32> to vector<128x32xf32>
    %53 = vector.extract_strided_slice %5 {offsets = [0, 192], sizes = [128, 32], strides = [1, 1]} : vector<128x384xf32> to vector<128x32xf32>
    %54 = vector.extract_strided_slice %5 {offsets = [0, 320], sizes = [128, 32], strides = [1, 1]} : vector<128x384xf32> to vector<128x32xf32>
    %cst_23 = arith.constant dense<0.000000e+00> : vector<128x128xf32>
    %55 = tpu.matmul %52, %53, %cst_23 {dimension_numbers = #tpu.dot_dimension_numbers<[1], [1], [0], [0], [0, 0, 1, 0], [], []>} : vector<128x32xf32>, vector<128x32xf32>, vector<128x128xf32> -> vector<128x128xf32>
    %cst_24 = arith.constant 0.0883883461 : f32
    %56 = vector.broadcast %cst_24 : f32 to vector<128x128xf32>
    %57 = arith.mulf %55, %56 : vector<128x128xf32>
    %58 = math.floor %57 : vector<128x128xf32>
    %59 = arith.addf %58, %6 : vector<128x128xf32>
    %cst_25 = arith.constant dense<0xFF800000> : vector<128xf32>
    %60 = vector.multi_reduction <maximumf>, %59, %cst_25 [1] : vector<128x128xf32> to vector<128xf32>
    %61 = vector.shape_cast %60 : vector<128xf32> to vector<128x1xf32>
    %62 = vector.broadcast %61 : vector<128x1xf32> to vector<128x128xf32>
    %63 = arith.subf %59, %62 : vector<128x128xf32>
    %64 = math.exp %63 : vector<128x128xf32>
    %cst_26 = arith.constant dense<0.000000e+00> : vector<128xf32>
    %65 = vector.multi_reduction <add>, %64, %cst_26 [1] : vector<128x128xf32> to vector<128xf32>
    %66 = vector.shape_cast %65 : vector<128xf32> to vector<128x1xf32>
    %67 = tpu.reciprocal %66 {approx = true} : vector<128x1xf32> -> vector<128x1xf32>
    %cst_27 = arith.constant dense<0.000000e+00> : vector<128x32xf32>
    %68 = tpu.matmul %64, %54, %cst_27 {dimension_numbers = #tpu.dot_dimension_numbers<[1], [0], [0], [1], [0, 0, 1, 1], [], []>} : vector<128x128xf32>, vector<128x32xf32>, vector<128x32xf32> -> vector<128x32xf32>
    %69 = vector.broadcast %67 : vector<128x1xf32> to vector<128x32xf32>
    %70 = arith.mulf %68, %69 : vector<128x32xf32>
    %c64 = arith.constant 64 : index
    %c0_28 = arith.constant 0 : index
    %71 = vector.load %arg5[%c64, %c0_28] : memref<128x128xf32, #tpu.memory_space<vmem>>, vector<32x128xf32>
    %cst_29 = arith.constant dense<0.000000e+00> : vector<128x128xf32>
    %72 = tpu.matmul %70, %71, %cst_29 {dimension_numbers = #tpu.dot_dimension_numbers<[1], [0], [0], [1], [0, 0, 1, 1], [], []>} : vector<128x32xf32>, vector<32x128xf32>, vector<128x128xf32> -> vector<128x128xf32>
    %73 = arith.addf %51, %72 : vector<128x128xf32>
    %74 = vector.extract_strided_slice %5 {offsets = [0, 96], sizes = [128, 32], strides = [1, 1]} : vector<128x384xf32> to vector<128x32xf32>
    %75 = vector.extract_strided_slice %5 {offsets = [0, 224], sizes = [128, 32], strides = [1, 1]} : vector<128x384xf32> to vector<128x32xf32>
    %76 = vector.extract_strided_slice %5 {offsets = [0, 352], sizes = [128, 32], strides = [1, 1]} : vector<128x384xf32> to vector<128x32xf32>
    %cst_30 = arith.constant dense<0.000000e+00> : vector<128x128xf32>
    %77 = tpu.matmul %74, %75, %cst_30 {dimension_numbers = #tpu.dot_dimension_numbers<[1], [1], [0], [0], [0, 0, 1, 0], [], []>} : vector<128x32xf32>, vector<128x32xf32>, vector<128x128xf32> -> vector<128x128xf32>
    %cst_31 = arith.constant 0.0883883461 : f32
    %78 = vector.broadcast %cst_31 : f32 to vector<128x128xf32>
    %79 = arith.mulf %77, %78 : vector<128x128xf32>
    %80 = math.floor %79 : vector<128x128xf32>
    %81 = arith.addf %80, %6 : vector<128x128xf32>
    %cst_32 = arith.constant dense<0xFF800000> : vector<128xf32>
    %82 = vector.multi_reduction <maximumf>, %81, %cst_32 [1] : vector<128x128xf32> to vector<128xf32>
    %83 = vector.shape_cast %82 : vector<128xf32> to vector<128x1xf32>
    %84 = vector.broadcast %83 : vector<128x1xf32> to vector<128x128xf32>
    %85 = arith.subf %81, %84 : vector<128x128xf32>
    %86 = math.exp %85 : vector<128x128xf32>
    %cst_33 = arith.constant dense<0.000000e+00> : vector<128xf32>
    %87 = vector.multi_reduction <add>, %86, %cst_33 [1] : vector<128x128xf32> to vector<128xf32>
    %88 = vector.shape_cast %87 : vector<128xf32> to vector<128x1xf32>
    %89 = tpu.reciprocal %88 {approx = true} : vector<128x1xf32> -> vector<128x1xf32>
    %cst_34 = arith.constant dense<0.000000e+00> : vector<128x32xf32>
    %90 = tpu.matmul %86, %76, %cst_34 {dimension_numbers = #tpu.dot_dimension_numbers<[1], [0], [0], [1], [0, 0, 1, 1], [], []>} : vector<128x128xf32>, vector<128x32xf32>, vector<128x32xf32> -> vector<128x32xf32>
    %91 = vector.broadcast %89 : vector<128x1xf32> to vector<128x32xf32>
    %92 = arith.mulf %90, %91 : vector<128x32xf32>
    %c96 = arith.constant 96 : index
    %c0_35 = arith.constant 0 : index
    %93 = vector.load %arg5[%c96, %c0_35] : memref<128x128xf32, #tpu.memory_space<vmem>>, vector<32x128xf32>
    %cst_36 = arith.constant dense<0.000000e+00> : vector<128x128xf32>
    %94 = tpu.matmul %92, %93, %cst_36 {dimension_numbers = #tpu.dot_dimension_numbers<[1], [0], [0], [1], [0, 0, 1, 1], [], []>} : vector<128x32xf32>, vector<32x128xf32>, vector<128x128xf32> -> vector<128x128xf32>
    %95 = arith.addf %73, %94 : vector<128x128xf32>
    %c0_37 = arith.constant 0 : index
    %c0_38 = arith.constant 0 : index
    %96 = vector.load %arg6[%c0_37, %c0_38] : memref<1x128xf32, #tpu.memory_space<vmem>>, vector<1x128xf32>
    %97 = vector.broadcast %96 : vector<1x128xf32> to vector<128x128xf32>
    %98 = arith.addf %95, %97 : vector<128x128xf32>
    %c0_39 = arith.constant 0 : index
    %c0_40 = arith.constant 0 : index
    %99 = vector.load %arg7[%c0_39, %c0_40] : memref<128x128xf32, #tpu.memory_space<vmem>>, vector<128x128xf32>
    tpu.vector_store %arg7[%c0_39, %c0_40], %98 {strides = array<i32>} : memref<128x128xf32, #tpu.memory_space<vmem>>, vector<128x128xf32>,
    return
  }
  func.func @transform_0(%arg0: i32) -> (i32, i32) {
    %c0_i32 = arith.constant 0 : i32
    %c0_i32_0 = arith.constant 0 : i32
    return %arg0, %c0_i32 : i32, i32
  }
  func.func @transform_1(%arg0: i32) -> (i32, i32) {
    %c0_i32 = arith.constant 0 : i32
    %c0_i32_0 = arith.constant 0 : i32
    %c0_i32_1 = arith.constant 0 : i32
    return %c0_i32, %c0_i32_0 : i32, i32
  }
  func.func @transform_2(%arg0: i32) -> (i32, i32) {
    %c0_i32 = arith.constant 0 : i32
    %c0_i32_0 = arith.constant 0 : i32
    %c0_i32_1 = arith.constant 0 : i32
    return %c0_i32, %c0_i32_0 : i32, i32
  }
  func.func @transform_3(%arg0: i32) -> (i32, i32) {
    %c0_i32 = arith.constant 0 : i32
    %c0_i32_0 = arith.constant 0 : i32
    %c0_i32_1 = arith.constant 0 : i32
    return %c0_i32, %c0_i32_0 : i32, i32
  }
  func.func @transform_4(%arg0: i32) -> (i32, i32) {
    %c0_i32 = arith.constant 0 : i32
    %c0_i32_0 = arith.constant 0 : i32
    %c0_i32_1 = arith.constant 0 : i32
    return %c0_i32, %c0_i32_0 : i32, i32
  }
  func.func @transform_5(%arg0: i32) -> (i32, i32) {
    %c0_i32 = arith.constant 0 : i32
    %c0_i32_0 = arith.constant 0 : i32
    %c0_i32_1 = arith.constant 0 : i32
    return %c0_i32, %c0_i32_0 : i32, i32
  }
  func.func @transform_6(%arg0: i32) -> (i32, i32) {
    %c0_i32 = arith.constant 0 : i32
    %c0_i32_0 = arith.constant 0 : i32
    return %arg0, %c0_i32 : i32, i32
  }
}

</mosaic_0001>

<llo_original>
// kernel: mha_forward.1
$region0: #{mha_forward.1}
  #allocation0 [shape = 'u32[]', space=smem, size = 0x4, offset = 0x4, fixed_abs, tag = 'smem constant byte address 0x4 - core index']
  #allocation1 [shape = 'u32[72,128]{1,0:T(1,128)}', space=vmem, size = 0x9000, scoped, tag = 'internal scratch']
  %s0 = inlined_call_operand.vmem [shape: f32[256,128], index: 0, kind: input, shape index: {}]
  %s1 = inlined_call_operand.vmem [shape: f32[128,128], index: 1, kind: input, shape index: {}]
  %s2 = inlined_call_operand.vmem [shape: f32[128,384], index: 2, kind: input, shape index: {}]
  %s3 = inlined_call_operand.vmem [shape: f32[1,384], index: 3, kind: input, shape index: {}]
  %s4 = inlined_call_operand.vmem [shape: f32[128,128], index: 4, kind: input, shape index: {}]
  %s5 = inlined_call_operand.vmem [shape: f32[1,128], index: 5, kind: input, shape index: {}]
  %s6 = inlined_call_operand.hbm [shape: f32[256,128], index: 6, kind: output, shape index: {}]
  %s7 = sld [smem:[#allocation0]]
  $region57: #{mha_forward.1} parent=0
    _
  %s9 = ssub.s32 1, %s7
  %s10 = scalar_select 0, %s9, %s7
  $region1: #{mha_forward.1} parent=0
    #allocation2 [shape = 'u8[131072]{0}', space=vmem, size = 0x20000, scoped, tag = 'output window, operand 0']
    #allocation3 [shape = 's32[2]{0}', space=sflag, size = 0x8, scoped, tag = 'scoped memory for mha_forward.1']
    %11 = vsyncpa [#allocation3], 0
    %s12 = scalar_lea.sflag [#allocation3], 1
    %13 = vsyncpa %s12, 0
    loop: start=0, step=1, limit=4
    $region2: #{mha_forward.1} parent=1 // loop_pre_header
      _
    $region3: #{mha_forward.1} parent=1 // loop_header
      %s15 = sphi 0, %s19
      %p16 = scmp.ge.s32.totalorder %s15, 4
      %s25 = sphi 0, %s27
      %s28 = sphi 0, %s25
      %s29 = sphi 0, %s28
      %s45 = sphi 0, %s29
      %s49 = sphi 0, %s49
      %s51 = sphi 0, %s49
      %s52 = sphi 0, %s51
      %s66 = sphi 0, %s52
      %s70 = sphi 0, %s70
      %s72 = sphi 0, %s70
      %s73 = sphi 0, %s72
      %s87 = sphi 0, %s73
      %s91 = sphi 0, %s91
      %s93 = sphi 0, %s91
      %s94 = sphi 0, %s93
      %s108 = sphi 0, %s94
      %s112 = sphi 0, %s112
      %s114 = sphi 0, %s112
      %s115 = sphi 0, %s114
      %s129 = sphi 0, %s115
      %s133 = sphi 0, %s133
      %s135 = sphi 0, %s133
      %s136 = sphi 0, %s135
      %s150 = sphi 0, %s136
      %s156 = sphi 0, %s158
      %s159 = sphi 0, %s156
      %s160 = sphi 0, %s159
      %s176 = sphi 0, %s160
    $region4: #{mha_forward.1} parent=1 // loop_header_branch
      %18 = sbr.rel (%p16) target = $region8
    $region5: #{mha_forward.1} parent=1 // loop_body
      %s20 = ssub.s32 %s15, 1
      %s21 = ssub.s32 %s15, 2
      %s22 = sadd.s32 %s15, 1
      %s23 = ssub.s32 %s15, %s22
      %p24 = scmp.eq.s32.totalorder %s23, 0
      %s26 = sadd.s32 %s25, 1
      %s27 = scalar_select %p24, %s25, %s26
      %p30 = pneg %p24
      %p31 = scmp.eq.s32.totalorder %s15, 1
      %p32 = por %p30, %p31
      %p33 = scmp.ne.s32.totalorder %s25, %s28
      %p34 = scmp.eq.s32.totalorder %s15, 0
      %p35 = por %p33, %p34
      %p36 = scmp.ne.s32.totalorder %s25, %s28
      %p37 = scmp.eq.s32.totalorder %s20, 1
      %p38 = por %p36, %p37
      %p39 = scmp.ne.s32.totalorder %s28, %s29
      %p40 = scmp.eq.s32.totalorder %s20, 0
      %p41 = por %p39, %p40
      %p42 = scmp.ne.s32.totalorder %s28, %s29
      %p43 = scmp.eq.s32.totalorder %s21, 1
      %p44 = por %p42, %p43
      %p46 = scmp.ne.s32.totalorder %s29, %s45
      %p47 = scmp.eq.s32.totalorder %s21, 0
      %p48 = por %p46, %p47
      %s50 = sadd.s32 %s49, 1
      %p53 = scmp.eq.s32.totalorder %s15, 1
      %p54 = scmp.ne.s32.totalorder %s49, %s51
      %p55 = scmp.eq.s32.totalorder %s15, 0
      %p56 = por %p54, %p55
      %p57 = scmp.ne.s32.totalorder %s49, %s51
      %p58 = scmp.eq.s32.totalorder %s20, 1
      %p59 = por %p57, %p58
      %p60 = scmp.ne.s32.totalorder %s51, %s52
      %p61 = scmp.eq.s32.totalorder %s20, 0
      %p62 = por %p60, %p61
      %p63 = scmp.ne.s32.totalorder %s51, %s52
      %p64 = scmp.eq.s32.totalorder %s21, 1
      %p65 = por %p63, %p64
      %p67 = scmp.ne.s32.totalorder %s52, %s66
      %p68 = scmp.eq.s32.totalorder %s21, 0
      %p69 = por %p67, %p68
      %s71 = sadd.s32 %s70, 1
      %p74 = scmp.eq.s32.totalorder %s15, 1
      %p75 = scmp.ne.s32.totalorder %s70, %s72
      %p76 = scmp.eq.s32.totalorder %s15, 0
      %p77 = por %p75, %p76
      %p78 = scmp.ne.s32.totalorder %s70, %s72
      %p79 = scmp.eq.s32.totalorder %s20, 1
      %p80 = por %p78, %p79
      %p81 = scmp.ne.s32.totalorder %s72, %s73
      %p82 = scmp.eq.s32.totalorder %s20, 0
      %p83 = por %p81, %p82
      %p84 = scmp.ne.s32.totalorder %s72, %s73
      %p85 = scmp.eq.s32.totalorder %s21, 1
      %p86 = por %p84, %p85
      %p88 = scmp.ne.s32.totalorder %s73, %s87
      %p89 = scmp.eq.s32.totalorder %s21, 0
      %p90 = por %p88, %p89
      %s92 = sadd.s32 %s91, 1
      %p95 = scmp.eq.s32.totalorder %s15, 1
      %p96 = scmp.ne.s32.totalorder %s91, %s93
      %p97 = scmp.eq.s32.totalorder %s15, 0
      %p98 = por %p96, %p97
      %p99 = scmp.ne.s32.totalorder %s91, %s93
      %p100 = scmp.eq.s32.totalorder %s20, 1
      %p101 = por %p99, %p100
      %p102 = scmp.ne.s32.totalorder %s93, %s94
      %p103 = scmp.eq.s32.totalorder %s20, 0
      %p104 = por %p102, %p103
      %p105 = scmp.ne.s32.totalorder %s93, %s94
      %p106 = scmp.eq.s32.totalorder %s21, 1
      %p107 = por %p105, %p106
      %p109 = scmp.ne.s32.totalorder %s94, %s108
      %p110 = scmp.eq.s32.totalorder %s21, 0
      %p111 = por %p109, %p110
      %s113 = sadd.s32 %s112, 1
      %p116 = scmp.eq.s32.totalorder %s15, 1
      %p117 = scmp.ne.s32.totalorder %s112, %s114
      %p118 = scmp.eq.s32.totalorder %s15, 0
      %p119 = por %p117, %p118
      %p120 = scmp.ne.s32.totalorder %s112, %s114
      %p121 = scmp.eq.s32.totalorder %s20, 1
      %p122 = por %p120, %p121
      %p123 = scmp.ne.s32.totalorder %s114, %s115
      %p124 = scmp.eq.s32.totalorder %s20, 0
      %p125 = por %p123, %p124
      %p126 = scmp.ne.s32.totalorder %s114, %s115
      %p127 = scmp.eq.s32.totalorder %s21, 1
      %p128 = por %p126, %p127
      %p130 = scmp.ne.s32.totalorder %s115, %s129
      %p131 = scmp.eq.s32.totalorder %s21, 0
      %p132 = por %p130, %p131
      %s134 = sadd.s32 %s133, 1
      %p137 = scmp.eq.s32.totalorder %s15, 1
      %p138 = scmp.ne.s32.totalorder %s133, %s135
      %p139 = scmp.eq.s32.totalorder %s15, 0
      %p140 = por %p138, %p139
      %p141 = scmp.ne.s32.totalorder %s133, %s135
      %p142 = scmp.eq.s32.totalorder %s20, 1
      %p143 = por %p141, %p142
      %p144 = scmp.ne.s32.totalorder %s135, %s136
      %p145 = scmp.eq.s32.totalorder %s20, 0
      %p146 = por %p144, %p145
      %p147 = scmp.ne.s32.totalorder %s135, %s136
      %p148 = scmp.eq.s32.totalorder %s21, 1
      %p149 = por %p147, %p148
      %p151 = scmp.ne.s32.totalorder %s136, %s150
      %p152 = scmp.eq.s32.totalorder %s21, 0
      %p153 = por %p151, %p152
      %s154 = ssub.s32 %s15, %s22
      %p155 = scmp.eq.s32.totalorder %s154, 0
      %s157 = sadd.s32 %s156, 1
      %s158 = scalar_select %p155, %s156, %s157
      %p161 = pneg %p155
      %p162 = scmp.eq.s32.totalorder %s15, 1
      %p163 = por %p161, %p162
      %p164 = scmp.ne.s32.totalorder %s156, %s159
      %p165 = scmp.eq.s32.totalorder %s15, 0
      %p166 = por %p164, %p165
      %p167 = scmp.ne.s32.totalorder %s156, %s159
      %p168 = scmp.eq.s32.totalorder %s20, 1
      %p169 = por %p167, %p168
      %p170 = scmp.ne.s32.totalorder %s159, %s160
      %p171 = scmp.eq.s32.totalorder %s20, 0
      %p172 = por %p170, %p171
      %p173 = scmp.ne.s32.totalorder %s159, %s160
      %p174 = scmp.eq.s32.totalorder %s21, 1
      %p175 = por %p173, %p174
      %p177 = scmp.ne.s32.totalorder %s160, %s176
      %p178 = scmp.eq.s32.totalorder %s21, 0
      %p179 = por %p177, %p178
      %p180 = scmp.le.s32.totalorder 1, %s15
      %p181 = scmp.lt.s32.totalorder %s15, 3
      %p182 = pnand %p180, %p181
      %p183 = pneg %p182
      // Predicated region
      $region9: #{mha_forward.1} parent=5 // pred_check
        _
      $region10: #{mha_forward.1} parent=5 // pred_check_branch
        %185 = sbr.rel (%p182) target = $region12
      $region11: #{mha_forward.1} parent=5 // pred_region
        %s186 = ssub.s32 %s15, 1
        // Predicated region
        $region13: #{mha_forward.1} parent=11 // pred_check
          %p187 = pneg %p62
        $region14: #{mha_forward.1} parent=11 // pred_check_branch
          %189 = sbr.rel (%p187) target = $region16
        $region15: #{mha_forward.1} parent=11 // pred_region
          _
        $region16: #{mha_forward.1} parent=11 // pred_fallthru
          _
        // Predicated region
        $region17: #{mha_forward.1} parent=11 // pred_check
          %p190 = pneg %p83
        $region18: #{mha_forward.1} parent=11 // pred_check_branch
          %192 = sbr.rel (%p190) target = $region20
        $region19: #{mha_forward.1} parent=11 // pred_region
          _
        $region20: #{mha_forward.1} parent=11 // pred_fallthru
          _
        // Predicated region
        $region21: #{mha_forward.1} parent=11 // pred_check
          %p193 = pneg %p104
        $region22: #{mha_forward.1} parent=11 // pred_check_branch
          %195 = sbr.rel (%p193) target = $region24
        $region23: #{mha_forward.1} parent=11 // pred_region
          _
        $region24: #{mha_forward.1} parent=11 // pred_fallthru
          _
        // Predicated region
        $region25: #{mha_forward.1} parent=11 // pred_check
          %p196 = pneg %p125
        $region26: #{mha_forward.1} parent=11 // pred_check_branch
          %198 = sbr.rel (%p196) target = $region28
        $region27: #{mha_forward.1} parent=11 // pred_region
          _
        $region28: #{mha_forward.1} parent=11 // pred_fallthru
          _
        // Predicated region
        $region29: #{mha_forward.1} parent=11 // pred_check
          %p199 = pneg %p146
        $region30: #{mha_forward.1} parent=11 // pred_check_branch
          %201 = sbr.rel (%p199) target = $region32
        $region31: #{mha_forward.1} parent=11 // pred_region
          _
        $region32: #{mha_forward.1} parent=11 // pred_fallthru
          _
      $region12: #{mha_forward.1} parent=5 // pred_fallthru
        _
      %p202 = scmp.lt.s32.totalorder %s15, 2
      // Predicated region
      $region33: #{mha_forward.1} parent=5 // pred_check
        %p203 = pneg %p202
      $region34: #{mha_forward.1} parent=5 // pred_check_branch
        %205 = sbr.rel (%p203) target = $region36
      $region35: #{mha_forward.1} parent=5 // pred_region
        // Predicated region
        $region37: #{mha_forward.1} parent=35 // pred_check
          %p206 = pneg %p35
        $region38: #{mha_forward.1} parent=35 // pred_check_branch
          %208 = sbr.rel (%p206) target = $region40
        $region39: #{mha_forward.1} parent=35 // pred_region
          %s209 = smul.u32 16, %s15
          %p210 = scmp.lt.s32.totalorder %s209, 31
          %s211 = scalar_select %p210, %s209, 31
          %s212 = smul.addr %s211, 8
          %s213 = scalar_lea.vmem %s0, %s212
          %s214 = smul.u32 16, %s15
        $region40: #{mha_forward.1} parent=35 // pred_fallthru
          _
      $region36: #{mha_forward.1} parent=5 // pred_fallthru
        _
      %p215 = scmp.le.s32.totalorder 1, %s15
      %p216 = scmp.lt.s32.totalorder %s15, 3
      %p217 = pnand %p215, %p216
      %p218 = pneg %p217
      // Predicated region
      $region41: #{mha_forward.1} parent=5 // pred_check
        _
      $region42: #{mha_forward.1} parent=5 // pred_check_branch
        %220 = sbr.rel (%p217) target = $region44
      $region43: #{mha_forward.1} parent=5 // pred_region
        %s221 = ssub.s32 %s15, 1
        %s222 = smul.u32 16, %s20
        %p223 = scmp.lt.s32.totalorder %s222, 31
        %s224 = scalar_select %p223, %s222, 31
        %s225 = smul.addr %s224, 8
        %s226 = scalar_lea.vmem %s0, %s225
        %p227 = pneg %p41
        %p228 = pneg %p38
        %p229 = pneg %p62
        %p230 = pneg %p59
        %p231 = pneg %p83
        %p232 = pneg %p80
        %p233 = pneg %p104
        %p234 = pneg %p101
        %p235 = pneg %p125
        %p236 = pneg %p122
        %p237 = pneg %p146
        %p238 = pneg %p143
        %p239 = pneg %p172
        %p240 = pneg %p169
        %s241 = sand.u32 %s159, 1
        %s242 = scalar_lea.sflag [#allocation3], %s241
        %s243 = sand.u32 %s159, 1
        %s244 = smul.addr %s243, 128
        %s245 = scalar_lea.vmem [#allocation2], %s244
        %s246 = smul.u32 16, %s20
        %p247 = scmp.lt.s32.totalorder %s246, 31
        %s248 = scalar_select %p247, %s246, 31
        %s249 = smul.addr %s248, 8
        %s250 = scalar_lea.vmem %s0, %s249
        %s251 = smul.u32 16, %s20
        %s252 = smul.u32 16, %s20
        %v253 = vld [vmem:[%s250] sm:$0xff]
        %v254 = vld [vmem:[%s250 + $0x8] sm:$0xff]
        %v255 = vld [vmem:[%s250 + $0x10] sm:$0xff]
        %v256 = vld [vmem:[%s250 + $0x18] sm:$0xff]
        %v257 = vld [vmem:[%s250 + $0x20] sm:$0xff]
        %v258 = vld [vmem:[%s250 + $0x28] sm:$0xff]
        %v259 = vld [vmem:[%s250 + $0x30] sm:$0xff]
        %v260 = vld [vmem:[%s250 + $0x38] sm:$0xff]
        %v261 = vld [vmem:[%s250 + $0x40] sm:$0xff]
        %v262 = vld [vmem:[%s250 + $0x48] sm:$0xff]
        %v263 = vld [vmem:[%s250 + $0x50] sm:$0xff]
        %v264 = vld [vmem:[%s250 + $0x58] sm:$0xff]
        %v265 = vld [vmem:[%s250 + $0x60] sm:$0xff]
        %v266 = vld [vmem:[%s250 + $0x68] sm:$0xff]
        %v267 = vld [vmem:[%s250 + $0x70] sm:$0xff]
        %v268 = vld [vmem:[%s250 + $0x78] sm:$0xff]
        %v269 = vld [vmem:[%s2] sm:$0xff]
        %v270 = vld [vmem:[%s2 + $0x8] sm:$0xff]
        %v271 = vld [vmem:[%s2 + $0x10] sm:$0xff]
        %v272 = vld [vmem:[%s2 + $0x18] sm:$0xff]
        %v273 = vld [vmem:[%s2 + $0x20] sm:$0xff]
        %v274 = vld [vmem:[%s2 + $0x28] sm:$0xff]
        %v275 = vld [vmem:[%s2 + $0x30] sm:$0xff]
        %v276 = vld [vmem:[%s2 + $0x38] sm:$0xff]
        %v277 = vld [vmem:[%s2 + $0x40] sm:$0xff]
        %v278 = vld [vmem:[%s2 + $0x48] sm:$0xff]
        %v279 = vld [vmem:[%s2 + $0x50] sm:$0xff]
        %v280 = vld [vmem:[%s2 + $0x58] sm:$0xff]
        %v281 = vld [vmem:[%s2 + $0x60] sm:$0xff]
        %v282 = vld [vmem:[%s2 + $0x68] sm:$0xff]
        %v283 = vld [vmem:[%s2 + $0x70] sm:$0xff]
        %v284 = vld [vmem:[%s2 + $0x78] sm:$0xff]
        %v285 = vld [vmem:[%s2 + $0x80] sm:$0xff]
        %v286 = vld [vmem:[%s2 + $0x88] sm:$0xff]
        %v287 = vld [vmem:[%s2 + $0x90] sm:$0xff]
        %v288 = vld [vmem:[%s2 + $0x98] sm:$0xff]
        %v289 = vld [vmem:[%s2 + $0xa0] sm:$0xff]
        %v290 = vld [vmem:[%s2 + $0xa8] sm:$0xff]
        %v291 = vld [vmem:[%s2 + $0xb0] sm:$0xff]
        %v292 = vld [vmem:[%s2 + $0xb8] sm:$0xff]
        %v293 = vld [vmem:[%s2 + $0xc0] sm:$0xff]
        %v294 = vld [vmem:[%s2 + $0xc8] sm:$0xff]
        %v295 = vld [vmem:[%s2 + $0xd0] sm:$0xff]
        %v296 = vld [vmem:[%s2 + $0xd8] sm:$0xff]
        %v297 = vld [vmem:[%s2 + $0xe0] sm:$0xff]
        %v298 = vld [vmem:[%s2 + $0xe8] sm:$0xff]
        %v299 = vld [vmem:[%s2 + $0xf0] sm:$0xff]
        %v300 = vld [vmem:[%s2 + $0xf8] sm:$0xff]
        %v301 = vld [vmem:[%s2 + $0x100] sm:$0xff]
        %v302 = vld [vmem:[%s2 + $0x108] sm:$0xff]
        %v303 = vld [vmem:[%s2 + $0x110] sm:$0xff]
        %v304 = vld [vmem:[%s2 + $0x118] sm:$0xff]
        %v305 = vld [vmem:[%s2 + $0x120] sm:$0xff]
        %v306 = vld [vmem:[%s2 + $0x128] sm:$0xff]
        %v307 = vld [vmem:[%s2 + $0x130] sm:$0xff]
        %v308 = vld [vmem:[%s2 + $0x138] sm:$0xff]
        %v309 = vld [vmem:[%s2 + $0x140] sm:$0xff]
        %v310 = vld [vmem:[%s2 + $0x148] sm:$0xff]
        %v311 = vld [vmem:[%s2 + $0x150] sm:$0xff]
        %v312 = vld [vmem:[%s2 + $0x158] sm:$0xff]
        %v313 = vld [vmem:[%s2 + $0x160] sm:$0xff]
        %v314 = vld [vmem:[%s2 + $0x168] sm:$0xff]
        %v315 = vld [vmem:[%s2 + $0x170] sm:$0xff]
        %v316 = vld [vmem:[%s2 + $0x178] sm:$0xff]
        %v317 = vld [vmem:[%s3] sm:$0x7]
        %v319 = vperm.slane %v317, 0
        %v320 = vperm.slane %v317, 1
        %v321 = vperm.slane %v317, 2
        %325 = vmatpush.msra.mxu0 %v314
        %326 = vmatpush.msra.mxu0 %v311
        %327 = vmatpush.msra.mxu0 %v308
        %328 = vmatpush.msra.mxu0 %v305
        %329 = vmatpush.msra.mxu0 %v302
        %330 = vmatpush.msra.mxu0 %v299
        %331 = vmatpush.msra.mxu0 %v296
        %332 = vmatpush.msra.mxu0 %v293
        %333 = vmatpush.msra.mxu0 %v290
        %334 = vmatpush.msra.mxu0 %v287
        %335 = vmatpush.msra.mxu0 %v284
        %336 = vmatpush.msra.mxu0 %v281
        %337 = vmatpush.msra.mxu0 %v278
        %338 = vmatpush.msra.mxu0 %v275
        %339 = vmatpush.msra.mxu0 %v272
        %340 = vmatpush.msra.mxu0 %v269
        %341 = vmatmul.f32.gmra.mxu0 %v253
        %v342 = vpop.f32.mrf.mxu0
        %v343 = vadd.f32 %v319, %v342
        %344 = vmatmul.f32.gmra.mxu0 %v254
        %v345 = vpop.f32.mrf.mxu0
        %v346 = vadd.f32 %v319, %v345
        %347 = vmatmul.f32.gmra.mxu0 %v255
        %v348 = vpop.f32.mrf.mxu0
        %v349 = vadd.f32 %v319, %v348
        %350 = vmatmul.f32.gmra.mxu0 %v256
        %v351 = vpop.f32.mrf.mxu0
        %v352 = vadd.f32 %v319, %v351
        %353 = vmatmul.f32.gmra.mxu0 %v257
        %v354 = vpop.f32.mrf.mxu0
        %v355 = vadd.f32 %v319, %v354
        %356 = vmatmul.f32.gmra.mxu0 %v258
        %v357 = vpop.f32.mrf.mxu0
        %v358 = vadd.f32 %v319, %v357
        %359 = vmatmul.f32.gmra.mxu0 %v259
        %v360 = vpop.f32.mrf.mxu0
        %v361 = vadd.f32 %v319, %v360
        %362 = vmatmul.f32.gmra.mxu0 %v260
        %v363 = vpop.f32.mrf.mxu0
        %v364 = vadd.f32 %v319, %v363
        %365 = vmatmul.f32.gmra.mxu0 %v261
        %v366 = vpop.f32.mrf.mxu0
        %v367 = vadd.f32 %v319, %v366
        %368 = vmatmul.f32.gmra.mxu0 %v262
        %v369 = vpop.f32.mrf.mxu0
        %v370 = vadd.f32 %v319, %v369
        %371 = vmatmul.f32.gmra.mxu0 %v263
        %v372 = vpop.f32.mrf.mxu0
        %v373 = vadd.f32 %v319, %v372
        %374 = vmatmul.f32.gmra.mxu0 %v264
        %v375 = vpop.f32.mrf.mxu0
        %v376 = vadd.f32 %v319, %v375
        %377 = vmatmul.f32.gmra.mxu0 %v265
        %v378 = vpop.f32.mrf.mxu0
        %v379 = vadd.f32 %v319, %v378
        %380 = vmatmul.f32.gmra.mxu0 %v266
        %v381 = vpop.f32.mrf.mxu0
        %v382 = vadd.f32 %v319, %v381
        %383 = vmatmul.f32.gmra.mxu0 %v267
        %v384 = vpop.f32.mrf.mxu0
        %v385 = vadd.f32 %v319, %v384
        %386 = vmatmul.f32.gmra.mxu0 %v268
        %v387 = vpop.f32.mrf.mxu0
        %v388 = vadd.f32 %v319, %v387
        %389 = vdwg.mxu0
        %390 = vmatpush.msra.mxu0 %v315
        %391 = vmatpush.msra.mxu0 %v312
        %392 = vmatpush.msra.mxu0 %v309
        %393 = vmatpush.msra.mxu0 %v306
        %394 = vmatpush.msra.mxu0 %v303
        %395 = vmatpush.msra.mxu0 %v300
        %396 = vmatpush.msra.mxu0 %v297
        %397 = vmatpush.msra.mxu0 %v294
        %398 = vmatpush.msra.mxu0 %v291
        %399 = vmatpush.msra.mxu0 %v288
        %400 = vmatpush.msra.mxu0 %v285
        %401 = vmatpush.msra.mxu0 %v282
        %402 = vmatpush.msra.mxu0 %v279
        %403 = vmatpush.msra.mxu0 %v276
        %404 = vmatpush.msra.mxu0 %v273
        %405 = vmatpush.msra.mxu0 %v270
        %406 = vmatmul.f32.gmra.mxu0 %v253
        %v407 = vpop.f32.mrf.mxu0
        %v408 = vadd.f32 %v320, %v407
        %409 = vmatmul.f32.gmra.mxu0 %v254
        %v410 = vpop.f32.mrf.mxu0
        %v411 = vadd.f32 %v320, %v410
        %412 = vmatmul.f32.gmra.mxu0 %v255
        %v413 = vpop.f32.mrf.mxu0
        %v414 = vadd.f32 %v320, %v413
        %415 = vmatmul.f32.gmra.mxu0 %v256
        %v416 = vpop.f32.mrf.mxu0
        %v417 = vadd.f32 %v320, %v416
        %418 = vmatmul.f32.gmra.mxu0 %v257
        %v419 = vpop.f32.mrf.mxu0
        %v420 = vadd.f32 %v320, %v419
        %421 = vmatmul.f32.gmra.mxu0 %v258
        %v422 = vpop.f32.mrf.mxu0
        %v423 = vadd.f32 %v320, %v422
        %424 = vmatmul.f32.gmra.mxu0 %v259
        %v425 = vpop.f32.mrf.mxu0
        %v426 = vadd.f32 %v320, %v425
        %427 = vmatmul.f32.gmra.mxu0 %v260
        %v428 = vpop.f32.mrf.mxu0
        %v429 = vadd.f32 %v320, %v428
        %430 = vmatmul.f32.gmra.mxu0 %v261
        %v431 = vpop.f32.mrf.mxu0
        %v432 = vadd.f32 %v320, %v431
        %433 = vmatmul.f32.gmra.mxu0 %v262
        %v434 = vpop.f32.mrf.mxu0
        %v435 = vadd.f32 %v320, %v434
        %436 = vmatmul.f32.gmra.mxu0 %v263
        %v437 = vpop.f32.mrf.mxu0
        %v438 = vadd.f32 %v320, %v437
        %439 = vmatmul.f32.gmra.mxu0 %v264
        %v440 = vpop.f32.mrf.mxu0
        %v441 = vadd.f32 %v320, %v440
        %442 = vmatmul.f32.gmra.mxu0 %v265
        %v443 = vpop.f32.mrf.mxu0
        %v444 = vadd.f32 %v320, %v443
        %445 = vmatmul.f32.gmra.mxu0 %v266
        %v446 = vpop.f32.mrf.mxu0
        %v447 = vadd.f32 %v320, %v446
        %448 = vmatmul.f32.gmra.mxu0 %v267
        %v449 = vpop.f32.mrf.mxu0
        %v450 = vadd.f32 %v320, %v449
        %451 = vmatmul.f32.gmra.mxu0 %v268
        %v452 = vpop.f32.mrf.mxu0
        %v453 = vadd.f32 %v320, %v452
        %454 = vdwg.mxu0
        %455 = vmatpush.msra.mxu0 %v316
        %456 = vmatpush.msra.mxu0 %v313
        %457 = vmatpush.msra.mxu0 %v310
        %458 = vmatpush.msra.mxu0 %v307
        %459 = vmatpush.msra.mxu0 %v304
        %460 = vmatpush.msra.mxu0 %v301
        %461 = vmatpush.msra.mxu0 %v298
        %462 = vmatpush.msra.mxu0 %v295
        %463 = vmatpush.msra.mxu0 %v292
        %464 = vmatpush.msra.mxu0 %v289
        %465 = vmatpush.msra.mxu0 %v286
        %466 = vmatpush.msra.mxu0 %v283
        %467 = vmatpush.msra.mxu0 %v280
        %468 = vmatpush.msra.mxu0 %v277
        %469 = vmatpush.msra.mxu0 %v274
        %470 = vmatpush.msra.mxu0 %v271
        %471 = vmatmul.f32.gmra.mxu0 %v253
        %v472 = vpop.f32.mrf.mxu0
        %v473 = vadd.f32 %v321, %v472
        %474 = vmatmul.f32.gmra.mxu0 %v254
        %v475 = vpop.f32.mrf.mxu0
        %v476 = vadd.f32 %v321, %v475
        %477 = vmatmul.f32.gmra.mxu0 %v255
        %v478 = vpop.f32.mrf.mxu0
        %v479 = vadd.f32 %v321, %v478
        %480 = vmatmul.f32.gmra.mxu0 %v256
        %v481 = vpop.f32.mrf.mxu0
        %v482 = vadd.f32 %v321, %v481
        %483 = vmatmul.f32.gmra.mxu0 %v257
        %v484 = vpop.f32.mrf.mxu0
        %v485 = vadd.f32 %v321, %v484
        %486 = vmatmul.f32.gmra.mxu0 %v258
        %v487 = vpop.f32.mrf.mxu0
        %v488 = vadd.f32 %v321, %v487
        %489 = vmatmul.f32.gmra.mxu0 %v259
        %v490 = vpop.f32.mrf.mxu0
        %v491 = vadd.f32 %v321, %v490
        %492 = vmatmul.f32.gmra.mxu0 %v260
        %v493 = vpop.f32.mrf.mxu0
        %v494 = vadd.f32 %v321, %v493
        %495 = vmatmul.f32.gmra.mxu0 %v261
        %v496 = vpop.f32.mrf.mxu0
        %v497 = vadd.f32 %v321, %v496
        %498 = vmatmul.f32.gmra.mxu0 %v262
        %v499 = vpop.f32.mrf.mxu0
        %v500 = vadd.f32 %v321, %v499
        %501 = vmatmul.f32.gmra.mxu0 %v263
        %v502 = vpop.f32.mrf.mxu0
        %v503 = vadd.f32 %v321, %v502
        %504 = vmatmul.f32.gmra.mxu0 %v264
        %v505 = vpop.f32.mrf.mxu0
        %v506 = vadd.f32 %v321, %v505
        %507 = vmatmul.f32.gmra.mxu0 %v265
        %v508 = vpop.f32.mrf.mxu0
        %v509 = vadd.f32 %v321, %v508
        %510 = vmatmul.f32.gmra.mxu0 %v266
        %v511 = vpop.f32.mrf.mxu0
        %v512 = vadd.f32 %v321, %v511
        %513 = vmatmul.f32.gmra.mxu0 %v267
        %v514 = vpop.f32.mrf.mxu0
        %v515 = vadd.f32 %v321, %v514
        %516 = vmatmul.f32.gmra.mxu0 %v268
        %v517 = vpop.f32.mrf.mxu0
        %v518 = vadd.f32 %v321, %v517
        %519 = vdwg.mxu0
        %v520 = vld [vmem:[%s1] sm:$0xff]
        %v521 = vld [vmem:[%s1 + $0x8] sm:$0xff]
        %v522 = vld [vmem:[%s1 + $0x10] sm:$0xff]
        %v523 = vld [vmem:[%s1 + $0x18] sm:$0xff]
        %v524 = vld [vmem:[%s1 + $0x20] sm:$0xff]
        %v525 = vld [vmem:[%s1 + $0x28] sm:$0xff]
        %v526 = vld [vmem:[%s1 + $0x30] sm:$0xff]
        %v527 = vld [vmem:[%s1 + $0x38] sm:$0xff]
        %v528 = vld [vmem:[%s1 + $0x40] sm:$0xff]
        %v529 = vld [vmem:[%s1 + $0x48] sm:$0xff]
        %v530 = vld [vmem:[%s1 + $0x50] sm:$0xff]
        %v531 = vld [vmem:[%s1 + $0x58] sm:$0xff]
        %v532 = vld [vmem:[%s1 + $0x60] sm:$0xff]
        %v533 = vld [vmem:[%s1 + $0x68] sm:$0xff]
        %v534 = vld [vmem:[%s1 + $0x70] sm:$0xff]
        %v535 = vld [vmem:[%s1 + $0x78] sm:$0xff]
        %vm536 = vcmask 261120
        %v538 = vsel %vm536, %v343, 0
        %v541 = vsel %vm536, %v346, 0
        %v544 = vsel %vm536, %v349, 0
        %v547 = vsel %vm536, %v352, 0
        %v550 = vsel %vm536, %v355, 0
        %v553 = vsel %vm536, %v358, 0
        %v556 = vsel %vm536, %v361, 0
        %v559 = vsel %vm536, %v364, 0
        %v562 = vsel %vm536, %v367, 0
        %v565 = vsel %vm536, %v370, 0
        %v568 = vsel %vm536, %v373, 0
        %v571 = vsel %vm536, %v376, 0
        %v574 = vsel %vm536, %v379, 0
        %v577 = vsel %vm536, %v382, 0
        %v580 = vsel %vm536, %v385, 0
        %v583 = vsel %vm536, %v388, 0
        %v586 = vsel %vm536, %v408, 0
        %v589 = vsel %vm536, %v411, 0
        %v592 = vsel %vm536, %v414, 0
        %v595 = vsel %vm536, %v417, 0
        %v598 = vsel %vm536, %v420, 0
        %v601 = vsel %vm536, %v423, 0
        %v604 = vsel %vm536, %v426, 0
        %v607 = vsel %vm536, %v429, 0
        %v610 = vsel %vm536, %v432, 0
        %v613 = vsel %vm536, %v435, 0
        %v616 = vsel %vm536, %v438, 0
        %v619 = vsel %vm536, %v441, 0
        %v622 = vsel %vm536, %v444, 0
        %v625 = vsel %vm536, %v447, 0
        %v628 = vsel %vm536, %v450, 0
        %v631 = vsel %vm536, %v453, 0
        %633 = vmatpush.xpose.msra.mxu0 %v631
        %634 = vmatpush.xpose.msra.mxu0 %v628
        %635 = vmatpush.xpose.msra.mxu0 %v625
        %636 = vmatpush.xpose.msra.mxu0 %v622
        %637 = vmatpush.xpose.msra.mxu0 %v619
        %638 = vmatpush.xpose.msra.mxu0 %v616
        %639 = vmatpush.xpose.msra.mxu0 %v613
        %640 = vmatpush.xpose.msra.mxu0 %v610
        %641 = vmatpush.xpose.msra.mxu0 %v607
        %642 = vmatpush.xpose.msra.mxu0 %v604
        %643 = vmatpush.xpose.msra.mxu0 %v601
        %644 = vmatpush.xpose.msra.mxu0 %v598
        %645 = vmatpush.xpose.msra.mxu0 %v595
        %646 = vmatpush.xpose.msra.mxu0 %v592
        %647 = vmatpush.xpose.msra.mxu0 %v589
        %648 = vmatpush.xpose.msra.mxu0 %v586
        %649 = vmatmul.f32.gmra.mxu0 %v538
        %v650 = vpop.f32.mrf.mxu0
        %v651 = vadd.f32 0.0, %v650
        %652 = vmatmul.f32.gmra.mxu0 %v541
        %v653 = vpop.f32.mrf.mxu0
        %v654 = vadd.f32 0.0, %v653
        %655 = vmatmul.f32.gmra.mxu0 %v544
        %v656 = vpop.f32.mrf.mxu0
        %v657 = vadd.f32 0.0, %v656
        %658 = vmatmul.f32.gmra.mxu0 %v547
        %v659 = vpop.f32.mrf.mxu0
        %v660 = vadd.f32 0.0, %v659
        %661 = vmatmul.f32.gmra.mxu0 %v550
        %v662 = vpop.f32.mrf.mxu0
        %v663 = vadd.f32 0.0, %v662
        %664 = vmatmul.f32.gmra.mxu0 %v553
        %v665 = vpop.f32.mrf.mxu0
        %v666 = vadd.f32 0.0, %v665
        %667 = vmatmul.f32.gmra.mxu0 %v556
        %v668 = vpop.f32.mrf.mxu0
        %v669 = vadd.f32 0.0, %v668
        %670 = vmatmul.f32.gmra.mxu0 %v559
        %v671 = vpop.f32.mrf.mxu0
        %v672 = vadd.f32 0.0, %v671
        %673 = vmatmul.f32.gmra.mxu0 %v562
        %v674 = vpop.f32.mrf.mxu0
        %v675 = vadd.f32 0.0, %v674
        %676 = vmatmul.f32.gmra.mxu0 %v565
        %v677 = vpop.f32.mrf.mxu0
        %v678 = vadd.f32 0.0, %v677
        %679 = vmatmul.f32.gmra.mxu0 %v568
        %v680 = vpop.f32.mrf.mxu0
        %v681 = vadd.f32 0.0, %v680
        %682 = vmatmul.f32.gmra.mxu0 %v571
        %v683 = vpop.f32.mrf.mxu0
        %v684 = vadd.f32 0.0, %v683
        %685 = vmatmul.f32.gmra.mxu0 %v574
        %v686 = vpop.f32.mrf.mxu0
        %v687 = vadd.f32 0.0, %v686
        %688 = vmatmul.f32.gmra.mxu0 %v577
        %v689 = vpop.f32.mrf.mxu0
        %v690 = vadd.f32 0.0, %v689
        %691 = vmatmul.f32.gmra.mxu0 %v580
        %v692 = vpop.f32.mrf.mxu0
        %v693 = vadd.f32 0.0, %v692
        %694 = vmatmul.f32.gmra.mxu0 %v583
        %v695 = vpop.f32.mrf.mxu0
        %v696 = vadd.f32 0.0, %v695
        %697 = vdwg.mxu0
        %v698 = vmul.f32 %v651, 0.088388346
        %v699 = vmul.f32 %v654, 0.088388346
        %v700 = vmul.f32 %v657, 0.088388346
        %v701 = vmul.f32 %v660, 0.088388346
        %v702 = vmul.f32 %v663, 0.088388346
        %v703 = vmul.f32 %v666, 0.088388346
        %v704 = vmul.f32 %v669, 0.088388346
        %v705 = vmul.f32 %v672, 0.088388346
        %v706 = vmul.f32 %v675, 0.088388346
        %v707 = vmul.f32 %v678, 0.088388346
        %v708 = vmul.f32 %v681, 0.088388346
        %v709 = vmul.f32 %v684, 0.088388346
        %v710 = vmul.f32 %v687, 0.088388346
        %v711 = vmul.f32 %v690, 0.088388346
        %v712 = vmul.f32 %v693, 0.088388346
        %v713 = vmul.f32 %v696, 0.088388346
        %v714 = vfloor.f32 %v698
        %v715 = vfloor.f32 %v699
        %v716 = vfloor.f32 %v700
        %v717 = vfloor.f32 %v701
        %v718 = vfloor.f32 %v702
        %v719 = vfloor.f32 %v703
        %v720 = vfloor.f32 %v704
        %v721 = vfloor.f32 %v705
        %v722 = vfloor.f32 %v706
        %v723 = vfloor.f32 %v707
        %v724 = vfloor.f32 %v708
        %v725 = vfloor.f32 %v709
        %v726 = vfloor.f32 %v710
        %v727 = vfloor.f32 %v711
        %v728 = vfloor.f32 %v712
        %v729 = vfloor.f32 %v713
        %v730 = vadd.f32 %v714, %v520
        %v731 = vadd.f32 %v715, %v521
        %v732 = vadd.f32 %v716, %v522
        %v733 = vadd.f32 %v717, %v523
        %v734 = vadd.f32 %v718, %v524
        %v735 = vadd.f32 %v719, %v525
        %v736 = vadd.f32 %v720, %v526
        %v737 = vadd.f32 %v721, %v527
        %v738 = vadd.f32 %v722, %v528
        %v739 = vadd.f32 %v723, %v529
        %v740 = vadd.f32 %v724, %v530
        %v741 = vadd.f32 %v725, %v531
        %v742 = vadd.f32 %v726, %v532
        %v743 = vadd.f32 %v727, %v533
        %v744 = vadd.f32 %v728, %v534
        %v745 = vadd.f32 %v729, %v535
        %746 = vmax.xlane.f32.xlu0 %v730
        %v747 = vpop.xlane.xlu0 %746
        %748 = vmax.xlane.f32.xlu0 %v731
        %v749 = vpop.xlane.xlu0 %748
        %750 = vmax.xlane.f32.xlu0 %v732
        %v751 = vpop.xlane.xlu0 %750
        %752 = vmax.xlane.f32.xlu0 %v733
        %v753 = vpop.xlane.xlu0 %752
        %754 = vmax.xlane.f32.xlu0 %v734
        %v755 = vpop.xlane.xlu0 %754
        %756 = vmax.xlane.f32.xlu0 %v735
        %v757 = vpop.xlane.xlu0 %756
        %758 = vmax.xlane.f32.xlu0 %v736
        %v759 = vpop.xlane.xlu0 %758
        %760 = vmax.xlane.f32.xlu0 %v737
        %v761 = vpop.xlane.xlu0 %760
        %762 = vmax.xlane.f32.xlu0 %v738
        %v763 = vpop.xlane.xlu0 %762
        %764 = vmax.xlane.f32.xlu0 %v739
        %v765 = vpop.xlane.xlu0 %764
        %766 = vmax.xlane.f32.xlu0 %v740
        %v767 = vpop.xlane.xlu0 %766
        %768 = vmax.xlane.f32.xlu0 %v741
        %v769 = vpop.xlane.xlu0 %768
        %770 = vmax.xlane.f32.xlu0 %v742
        %v771 = vpop.xlane.xlu0 %770
        %772 = vmax.xlane.f32.xlu0 %v743
        %v773 = vpop.xlane.xlu0 %772
        %774 = vmax.xlane.f32.xlu0 %v744
        %v775 = vpop.xlane.xlu0 %774
        %776 = vmax.xlane.f32.xlu0 %v745
        %v777 = vpop.xlane.xlu0 %776
        %v778 = vsub.f32 %v730, %v747
        %v779 = vsub.f32 %v731, %v749
        %v780 = vsub.f32 %v732, %v751
        %v781 = vsub.f32 %v733, %v753
        %v782 = vsub.f32 %v734, %v755
        %v783 = vsub.f32 %v735, %v757
        %v784 = vsub.f32 %v736, %v759
        %v785 = vsub.f32 %v737, %v761
        %v786 = vsub.f32 %v738, %v763
        %v787 = vsub.f32 %v739, %v765
        %v788 = vsub.f32 %v740, %v767
        %v789 = vsub.f32 %v741, %v769
        %v790 = vsub.f32 %v742, %v771
        %v791 = vsub.f32 %v743, %v773
        %v792 = vsub.f32 %v744, %v775
        %v793 = vsub.f32 %v745, %v777
        %v794 = vmul.f32 %v778, 1.442695
        %v795 = vpow.pop %v794
        %v796 = vmul.f32 %v779, 1.442695
        %v797 = vpow.pop %v796
        %v798 = vmul.f32 %v780, 1.442695
        %v799 = vpow.pop %v798
        %v800 = vmul.f32 %v781, 1.442695
        %v801 = vpow.pop %v800
        %v802 = vmul.f32 %v782, 1.442695
        %v803 = vpow.pop %v802
        %v804 = vmul.f32 %v783, 1.442695
        %v805 = vpow.pop %v804
        %v806 = vmul.f32 %v784, 1.442695
        %v807 = vpow.pop %v806
        %v808 = vmul.f32 %v785, 1.442695
        %v809 = vpow.pop %v808
        %v810 = vmul.f32 %v786, 1.442695
        %v811 = vpow.pop %v810
        %v812 = vmul.f32 %v787, 1.442695
        %v813 = vpow.pop %v812
        %v814 = vmul.f32 %v788, 1.442695
        %v815 = vpow.pop %v814
        %v816 = vmul.f32 %v789, 1.442695
        %v817 = vpow.pop %v816
        %v818 = vmul.f32 %v790, 1.442695
        %v819 = vpow.pop %v818
        %v820 = vmul.f32 %v791, 1.442695
        %v821 = vpow.pop %v820
        %v822 = vmul.f32 %v792, 1.442695
        %v823 = vpow.pop %v822
        %v824 = vmul.f32 %v793, 1.442695
        %v825 = vpow.pop %v824
        %826 = vadd.xlane.f32.xlu0 %v795
        %v827 = vpop.xlane.xlu0 %826
        %828 = vadd.xlane.f32.xlu0 %v797
        %v829 = vpop.xlane.xlu0 %828
        %830 = vadd.xlane.f32.xlu0 %v799
        %v831 = vpop.xlane.xlu0 %830
        %832 = vadd.xlane.f32.xlu0 %v801
        %v833 = vpop.xlane.xlu0 %832
        %834 = vadd.xlane.f32.xlu0 %v803
        %v835 = vpop.xlane.xlu0 %834
        %836 = vadd.xlane.f32.xlu0 %v805
        %v837 = vpop.xlane.xlu0 %836
        %838 = vadd.xlane.f32.xlu0 %v807
        %v839 = vpop.xlane.xlu0 %838
        %840 = vadd.xlane.f32.xlu0 %v809
        %v841 = vpop.xlane.xlu0 %840
        %842 = vadd.xlane.f32.xlu0 %v811
        %v843 = vpop.xlane.xlu0 %842
        %844 = vadd.xlane.f32.xlu0 %v813
        %v845 = vpop.xlane.xlu0 %844
        %846 = vadd.xlane.f32.xlu0 %v815
        %v847 = vpop.xlane.xlu0 %846
        %848 = vadd.xlane.f32.xlu0 %v817
        %v849 = vpop.xlane.xlu0 %848
        %850 = vadd.xlane.f32.xlu0 %v819
        %v851 = vpop.xlane.xlu0 %850
        %852 = vadd.xlane.f32.xlu0 %v821
        %v853 = vpop.xlane.xlu0 %852
        %854 = vadd.xlane.f32.xlu0 %v823
        %v855 = vpop.xlane.xlu0 %854
        %856 = vadd.xlane.f32.xlu0 %v825
        %v857 = vpop.xlane.xlu0 %856
        %v858 = vrcp.pop %v827
        %v859 = vrcp.pop %v829
        %v860 = vrcp.pop %v831
        %v861 = vrcp.pop %v833
        %v862 = vrcp.pop %v835
        %v863 = vrcp.pop %v837
        %v864 = vrcp.pop %v839
        %v865 = vrcp.pop %v841
        %v866 = vrcp.pop %v843
        %v867 = vrcp.pop %v845
        %v868 = vrcp.pop %v847
        %v869 = vrcp.pop %v849
        %v870 = vrcp.pop %v851
        %v871 = vrcp.pop %v853
        %v872 = vrcp.pop %v855
        %v873 = vrcp.pop %v857
        %874 = vmatpush.msra.mxu0 %v518
        %875 = vmatpush.msra.mxu0 %v515
        %876 = vmatpush.msra.mxu0 %v512
        %877 = vmatpush.msra.mxu0 %v509
        %878 = vmatpush.msra.mxu0 %v506
        %879 = vmatpush.msra.mxu0 %v503
        %880 = vmatpush.msra.mxu0 %v500
        %881 = vmatpush.msra.mxu0 %v497
        %882 = vmatpush.msra.mxu0 %v494
        %883 = vmatpush.msra.mxu0 %v491
        %884 = vmatpush.msra.mxu0 %v488
        %885 = vmatpush.msra.mxu0 %v485
        %886 = vmatpush.msra.mxu0 %v482
        %887 = vmatpush.msra.mxu0 %v479
        %888 = vmatpush.msra.mxu0 %v476
        %889 = vmatpush.msra.mxu0 %v473
        %890 = vmatmul.f32.gmra.mxu0 %v795
        %v891 = vpop.f32.mrf.mxu0
        %v892 = vadd.f32 0.0, %v891
        %893 = vmatmul.f32.gmra.mxu0 %v797
        %v894 = vpop.f32.mrf.mxu0
        %v895 = vadd.f32 0.0, %v894
        %896 = vmatmul.f32.gmra.mxu0 %v799
        %v897 = vpop.f32.mrf.mxu0
        %v898 = vadd.f32 0.0, %v897
        %899 = vmatmul.f32.gmra.mxu0 %v801
        %v900 = vpop.f32.mrf.mxu0
        %v901 = vadd.f32 0.0, %v900
        %902 = vmatmul.f32.gmra.mxu0 %v803
        %v903 = vpop.f32.mrf.mxu0
        %v904 = vadd.f32 0.0, %v903
        %905 = vmatmul.f32.gmra.mxu0 %v805
        %v906 = vpop.f32.mrf.mxu0
        %v907 = vadd.f32 0.0, %v906
        %908 = vmatmul.f32.gmra.mxu0 %v807
        %v909 = vpop.f32.mrf.mxu0
        %v910 = vadd.f32 0.0, %v909
        %911 = vmatmul.f32.gmra.mxu0 %v809
        %v912 = vpop.f32.mrf.mxu0
        %v913 = vadd.f32 0.0, %v912
        %914 = vmatmul.f32.gmra.mxu0 %v811
        %v915 = vpop.f32.mrf.mxu0
        %v916 = vadd.f32 0.0, %v915
        %917 = vmatmul.f32.gmra.mxu0 %v813
        %v918 = vpop.f32.mrf.mxu0
        %v919 = vadd.f32 0.0, %v918
        %920 = vmatmul.f32.gmra.mxu0 %v815
        %v921 = vpop.f32.mrf.mxu0
        %v922 = vadd.f32 0.0, %v921
        %923 = vmatmul.f32.gmra.mxu0 %v817
        %v924 = vpop.f32.mrf.mxu0
        %v925 = vadd.f32 0.0, %v924
        %926 = vmatmul.f32.gmra.mxu0 %v819
        %v927 = vpop.f32.mrf.mxu0
        %v928 = vadd.f32 0.0, %v927
        %929 = vmatmul.f32.gmra.mxu0 %v821
        %v930 = vpop.f32.mrf.mxu0
        %v931 = vadd.f32 0.0, %v930
        %932 = vmatmul.f32.gmra.mxu0 %v823
        %v933 = vpop.f32.mrf.mxu0
        %v934 = vadd.f32 0.0, %v933
        %935 = vmatmul.f32.gmra.mxu0 %v825
        %v936 = vpop.f32.mrf.mxu0
        %v937 = vadd.f32 0.0, %v936
        %938 = vdwg.mxu0
        %v939 = vmul.f32 %v892, %v858
        %v940 = vmul.f32 %v895, %v859
        %v941 = vmul.f32 %v898, %v860
        %v942 = vmul.f32 %v901, %v861
        %v943 = vmul.f32 %v904, %v862
        %v944 = vmul.f32 %v907, %v863
        %v945 = vmul.f32 %v910, %v864
        %v946 = vmul.f32 %v913, %v865
        %v947 = vmul.f32 %v916, %v866
        %v948 = vmul.f32 %v919, %v867
        %v949 = vmul.f32 %v922, %v868
        %v950 = vmul.f32 %v925, %v869
        %v951 = vmul.f32 %v928, %v870
        %v952 = vmul.f32 %v931, %v871
        %v953 = vmul.f32 %v934, %v872
        %v954 = vmul.f32 %v937, %v873
        %v955 = vld [vmem:[%s4] sm:$0xff]
        %v956 = vld [vmem:[%s4 + $0x8] sm:$0xff]
        %v957 = vld [vmem:[%s4 + $0x10] sm:$0xff]
        %v958 = vld [vmem:[%s4 + $0x18] sm:$0xff]
        %959 = vrot.lane.b32.xlu0 %v343, 96
        %v960 = vpop.permute.xlu0 %959
        %961 = vrot.lane.b32.xlu0 %v346, 96
        %v962 = vpop.permute.xlu0 %961
        %963 = vrot.lane.b32.xlu0 %v349, 96
        %v964 = vpop.permute.xlu0 %963
        %965 = vrot.lane.b32.xlu0 %v352, 96
        %v966 = vpop.permute.xlu0 %965
        %967 = vrot.lane.b32.xlu0 %v355, 96
        %v968 = vpop.permute.xlu0 %967
        %969 = vrot.lane.b32.xlu0 %v358, 96
        %v970 = vpop.permute.xlu0 %969
        %971 = vrot.lane.b32.xlu0 %v361, 96
        %v972 = vpop.permute.xlu0 %971
        %973 = vrot.lane.b32.xlu0 %v364, 96
        %v974 = vpop.permute.xlu0 %973
        %975 = vrot.lane.b32.xlu0 %v367, 96
        %v976 = vpop.permute.xlu0 %975
        %977 = vrot.lane.b32.xlu0 %v370, 96
        %v978 = vpop.permute.xlu0 %977
        %979 = vrot.lane.b32.xlu0 %v373, 96
        %v980 = vpop.permute.xlu0 %979
        %981 = vrot.lane.b32.xlu0 %v376, 96
        %v982 = vpop.permute.xlu0 %981
        %983 = vrot.lane.b32.xlu0 %v379, 96
        %v984 = vpop.permute.xlu0 %983
        %985 = vrot.lane.b32.xlu0 %v382, 96
        %v986 = vpop.permute.xlu0 %985
        %987 = vrot.lane.b32.xlu0 %v385, 96
        %v988 = vpop.permute.xlu0 %987
        %989 = vrot.lane.b32.xlu0 %v388, 96
        %v990 = vpop.permute.xlu0 %989
        %991 = vrot.lane.b32.xlu0 %v408, 96
        %v992 = vpop.permute.xlu0 %991
        %993 = vrot.lane.b32.xlu0 %v411, 96
        %v994 = vpop.permute.xlu0 %993
        %995 = vrot.lane.b32.xlu0 %v414, 96
        %v996 = vpop.permute.xlu0 %995
        %997 = vrot.lane.b32.xlu0 %v417, 96
        %v998 = vpop.permute.xlu0 %997
        %999 = vrot.lane.b32.xlu0 %v420, 96
        %v1000 = vpop.permute.xlu0 %999
        %1001 = vrot.lane.b32.xlu0 %v423, 96
        %v1002 = vpop.permute.xlu0 %1001
        %1003 = vrot.lane.b32.xlu0 %v426, 96
        %v1004 = vpop.permute.xlu0 %1003
        %1005 = vrot.lane.b32.xlu0 %v429, 96
        %v1006 = vpop.permute.xlu0 %1005
        %1007 = vrot.lane.b32.xlu0 %v432, 96
        %v1008 = vpop.permute.xlu0 %1007
        %1009 = vrot.lane.b32.xlu0 %v435, 96
        %v1010 = vpop.permute.xlu0 %1009
        %1011 = vrot.lane.b32.xlu0 %v438, 96
        %v1012 = vpop.permute.xlu0 %1011
        %1013 = vrot.lane.b32.xlu0 %v441, 96
        %v1014 = vpop.permute.xlu0 %1013
        %1015 = vrot.lane.b32.xlu0 %v444, 96
        %v1016 = vpop.permute.xlu0 %1015
        %1017 = vrot.lane.b32.xlu0 %v447, 96
        %v1018 = vpop.permute.xlu0 %1017
        %1019 = vrot.lane.b32.xlu0 %v450, 96
        %v1020 = vpop.permute.xlu0 %1019
        %1021 = vrot.lane.b32.xlu0 %v453, 96
        %v1022 = vpop.permute.xlu0 %1021
        %v1023 = vsel %vm536, %v960, 0
        %v1025 = vsel %vm536, %v962, 0
        %v1027 = vsel %vm536, %v964, 0
        %v1029 = vsel %vm536, %v966, 0
        %v1031 = vsel %vm536, %v968, 0
        %v1033 = vsel %vm536, %v970, 0
        %v1035 = vsel %vm536, %v972, 0
        %v1037 = vsel %vm536, %v974, 0
        %v1039 = vsel %vm536, %v976, 0
        %v1041 = vsel %vm536, %v978, 0
        %v1043 = vsel %vm536, %v980, 0
        %v1045 = vsel %vm536, %v982, 0
        %v1047 = vsel %vm536, %v984, 0
        %v1049 = vsel %vm536, %v986, 0
        %v1051 = vsel %vm536, %v988, 0
        %v1053 = vsel %vm536, %v990, 0
        %v1055 = vsel %vm536, %v992, 0
        %v1057 = vsel %vm536, %v994, 0
        %v1059 = vsel %vm536, %v996, 0
        %v1061 = vsel %vm536, %v998, 0
        %v1063 = vsel %vm536, %v1000, 0
        %v1065 = vsel %vm536, %v1002, 0
        %v1067 = vsel %vm536, %v1004, 0
        %v1069 = vsel %vm536, %v1006, 0
        %v1071 = vsel %vm536, %v1008, 0
        %v1073 = vsel %vm536, %v1010, 0
        %v1075 = vsel %vm536, %v1012, 0
        %v1077 = vsel %vm536, %v1014, 0
        %v1079 = vsel %vm536, %v1016, 0
        %v1081 = vsel %vm536, %v1018, 0
        %v1083 = vsel %vm536, %v1020, 0
        %v1085 = vsel %vm536, %v1022, 0
        %1087 = vmatpush.xpose.msra.mxu0 %v1085
        %1088 = vmatpush.xpose.msra.mxu0 %v1083
        %1089 = vmatpush.xpose.msra.mxu0 %v1081
        %1090 = vmatpush.xpose.msra.mxu0 %v1079
        %1091 = vmatpush.xpose.msra.mxu0 %v1077
        %1092 = vmatpush.xpose.msra.mxu0 %v1075
        %1093 = vmatpush.xpose.msra.mxu0 %v1073
        %1094 = vmatpush.xpose.msra.mxu0 %v1071
        %1095 = vmatpush.xpose.msra.mxu0 %v1069
        %1096 = vmatpush.xpose.msra.mxu0 %v1067
        %1097 = vmatpush.xpose.msra.mxu0 %v1065
        %1098 = vmatpush.xpose.msra.mxu0 %v1063
        %1099 = vmatpush.xpose.msra.mxu0 %v1061
        %1100 = vmatpush.xpose.msra.mxu0 %v1059
        %1101 = vmatpush.xpose.msra.mxu0 %v1057
        %1102 = vmatpush.xpose.msra.mxu0 %v1055
        %1103 = vmatmul.f32.gmra.mxu0 %v1023
        %v1104 = vpop.f32.mrf.mxu0
        %v1105 = vadd.f32 0.0, %v1104
        %1106 = vmatmul.f32.gmra.mxu0 %v1025
        %v1107 = vpop.f32.mrf.mxu0
        %v1108 = vadd.f32 0.0, %v1107
        %1109 = vmatmul.f32.gmra.mxu0 %v1027
        %v1110 = vpop.f32.mrf.mxu0
        %v1111 = vadd.f32 0.0, %v1110
        %1112 = vmatmul.f32.gmra.mxu0 %v1029
        %v1113 = vpop.f32.mrf.mxu0
        %v1114 = vadd.f32 0.0, %v1113
        %1115 = vmatmul.f32.gmra.mxu0 %v1031
        %v1116 = vpop.f32.mrf.mxu0
        %v1117 = vadd.f32 0.0, %v1116
        %1118 = vmatmul.f32.gmra.mxu0 %v1033
        %v1119 = vpop.f32.mrf.mxu0
        %v1120 = vadd.f32 0.0, %v1119
        %1121 = vmatmul.f32.gmra.mxu0 %v1035
        %v1122 = vpop.f32.mrf.mxu0
        %v1123 = vadd.f32 0.0, %v1122
        %1124 = vmatmul.f32.gmra.mxu0 %v1037
        %v1125 = vpop.f32.mrf.mxu0
        %v1126 = vadd.f32 0.0, %v1125
        %1127 = vmatmul.f32.gmra.mxu0 %v1039
        %v1128 = vpop.f32.mrf.mxu0
        %v1129 = vadd.f32 0.0, %v1128
        %1130 = vmatmul.f32.gmra.mxu0 %v1041
        %v1131 = vpop.f32.mrf.mxu0
        %v1132 = vadd.f32 0.0, %v1131
        %1133 = vmatmul.f32.gmra.mxu0 %v1043
        %v1134 = vpop.f32.mrf.mxu0
        %v1135 = vadd.f32 0.0, %v1134
        %1136 = vmatmul.f32.gmra.mxu0 %v1045
        %v1137 = vpop.f32.mrf.mxu0
        %v1138 = vadd.f32 0.0, %v1137
        %1139 = vmatmul.f32.gmra.mxu0 %v1047
        %v1140 = vpop.f32.mrf.mxu0
        %v1141 = vadd.f32 0.0, %v1140
        %1142 = vmatmul.f32.gmra.mxu0 %v1049
        %v1143 = vpop.f32.mrf.mxu0
        %v1144 = vadd.f32 0.0, %v1143
        %1145 = vmatmul.f32.gmra.mxu0 %v1051
        %v1146 = vpop.f32.mrf.mxu0
        %v1147 = vadd.f32 0.0, %v1146
        %1148 = vmatmul.f32.gmra.mxu0 %v1053
        %v1149 = vpop.f32.mrf.mxu0
        %v1150 = vadd.f32 0.0, %v1149
        %1151 = vdwg.mxu0
        %v1152 = vmul.f32 %v1105, 0.088388346
        %v1153 = vmul.f32 %v1108, 0.088388346
        %v1154 = vmul.f32 %v1111, 0.088388346
        %v1155 = vmul.f32 %v1114, 0.088388346
        %v1156 = vmul.f32 %v1117, 0.088388346
        %v1157 = vmul.f32 %v1120, 0.088388346
        %v1158 = vmul.f32 %v1123, 0.088388346
        %v1159 = vmul.f32 %v1126, 0.088388346
        %v1160 = vmul.f32 %v1129, 0.088388346
        %v1161 = vmul.f32 %v1132, 0.088388346
        %v1162 = vmul.f32 %v1135, 0.088388346
        %v1163 = vmul.f32 %v1138, 0.088388346
        %v1164 = vmul.f32 %v1141, 0.088388346
        %v1165 = vmul.f32 %v1144, 0.088388346
        %v1166 = vmul.f32 %v1147, 0.088388346
        %v1167 = vmul.f32 %v1150, 0.088388346
        %v1168 = vfloor.f32 %v1152
        %v1169 = vfloor.f32 %v1153
        %v1170 = vfloor.f32 %v1154
        %v1171 = vfloor.f32 %v1155
        %v1172 = vfloor.f32 %v1156
        %v1173 = vfloor.f32 %v1157
        %v1174 = vfloor.f32 %v1158
        %v1175 = vfloor.f32 %v1159
        %v1176 = vfloor.f32 %v1160
        %v1177 = vfloor.f32 %v1161
        %v1178 = vfloor.f32 %v1162
        %v1179 = vfloor.f32 %v1163
        %v1180 = vfloor.f32 %v1164
        %v1181 = vfloor.f32 %v1165
        %v1182 = vfloor.f32 %v1166
        %v1183 = vfloor.f32 %v1167
        %v1184 = vadd.f32 %v1168, %v520
        %v1185 = vadd.f32 %v1169, %v521
        %v1186 = vadd.f32 %v1170, %v522
        %v1187 = vadd.f32 %v1171, %v523
        %v1188 = vadd.f32 %v1172, %v524
        %v1189 = vadd.f32 %v1173, %v525
        %v1190 = vadd.f32 %v1174, %v526
        %v1191 = vadd.f32 %v1175, %v527
        %v1192 = vadd.f32 %v1176, %v528
        %v1193 = vadd.f32 %v1177, %v529
        %v1194 = vadd.f32 %v1178, %v530
        %v1195 = vadd.f32 %v1179, %v531
        %v1196 = vadd.f32 %v1180, %v532
        %v1197 = vadd.f32 %v1181, %v533
        %v1198 = vadd.f32 %v1182, %v534
        %v1199 = vadd.f32 %v1183, %v535
        %1200 = vmax.xlane.f32.xlu0 %v1184
        %v1201 = vpop.xlane.xlu0 %1200
        %1202 = vmax.xlane.f32.xlu0 %v1185
        %v1203 = vpop.xlane.xlu0 %1202
        %1204 = vmax.xlane.f32.xlu0 %v1186
        %v1205 = vpop.xlane.xlu0 %1204
        %1206 = vmax.xlane.f32.xlu0 %v1187
        %v1207 = vpop.xlane.xlu0 %1206
        %1208 = vmax.xlane.f32.xlu0 %v1188
        %v1209 = vpop.xlane.xlu0 %1208
        %1210 = vmax.xlane.f32.xlu0 %v1189
        %v1211 = vpop.xlane.xlu0 %1210
        %1212 = vmax.xlane.f32.xlu0 %v1190
        %v1213 = vpop.xlane.xlu0 %1212
        %1214 = vmax.xlane.f32.xlu0 %v1191
        %v1215 = vpop.xlane.xlu0 %1214
        %1216 = vmax.xlane.f32.xlu0 %v1192
        %v1217 = vpop.xlane.xlu0 %1216
        %1218 = vmax.xlane.f32.xlu0 %v1193
        %v1219 = vpop.xlane.xlu0 %1218
        %1220 = vmax.xlane.f32.xlu0 %v1194
        %v1221 = vpop.xlane.xlu0 %1220
        %1222 = vmax.xlane.f32.xlu0 %v1195
        %v1223 = vpop.xlane.xlu0 %1222
        %1224 = vmax.xlane.f32.xlu0 %v1196
        %v1225 = vpop.xlane.xlu0 %1224
        %1226 = vmax.xlane.f32.xlu0 %v1197
        %v1227 = vpop.xlane.xlu0 %1226
        %1228 = vmax.xlane.f32.xlu0 %v1198
        %v1229 = vpop.xlane.xlu0 %1228
        %1230 = vmax.xlane.f32.xlu0 %v1199
        %v1231 = vpop.xlane.xlu0 %1230
        %v1232 = vsub.f32 %v1184, %v1201
        %v1233 = vsub.f32 %v1185, %v1203
        %v1234 = vsub.f32 %v1186, %v1205
        %v1235 = vsub.f32 %v1187, %v1207
        %v1236 = vsub.f32 %v1188, %v1209
        %v1237 = vsub.f32 %v1189, %v1211
        %v1238 = vsub.f32 %v1190, %v1213
        %v1239 = vsub.f32 %v1191, %v1215
        %v1240 = vsub.f32 %v1192, %v1217
        %v1241 = vsub.f32 %v1193, %v1219
        %v1242 = vsub.f32 %v1194, %v1221
        %v1243 = vsub.f32 %v1195, %v1223
        %v1244 = vsub.f32 %v1196, %v1225
        %v1245 = vsub.f32 %v1197, %v1227
        %v1246 = vsub.f32 %v1198, %v1229
        %v1247 = vsub.f32 %v1199, %v1231
        %v1248 = vmul.f32 %v1232, 1.442695
        %v1249 = vpow.pop %v1248
        %v1250 = vmul.f32 %v1233, 1.442695
        %v1251 = vpow.pop %v1250
        %v1252 = vmul.f32 %v1234, 1.442695
        %v1253 = vpow.pop %v1252
        %v1254 = vmul.f32 %v1235, 1.442695
        %v1255 = vpow.pop %v1254
        %v1256 = vmul.f32 %v1236, 1.442695
        %v1257 = vpow.pop %v1256
        %v1258 = vmul.f32 %v1237, 1.442695
        %v1259 = vpow.pop %v1258
        %v1260 = vmul.f32 %v1238, 1.442695
        %v1261 = vpow.pop %v1260
        %v1262 = vmul.f32 %v1239, 1.442695
        %v1263 = vpow.pop %v1262
        %v1264 = vmul.f32 %v1240, 1.442695
        %v1265 = vpow.pop %v1264
        %v1266 = vmul.f32 %v1241, 1.442695
        %v1267 = vpow.pop %v1266
        %v1268 = vmul.f32 %v1242, 1.442695
        %v1269 = vpow.pop %v1268
        %v1270 = vmul.f32 %v1243, 1.442695
        %v1271 = vpow.pop %v1270
        %v1272 = vmul.f32 %v1244, 1.442695
        %v1273 = vpow.pop %v1272
        %v1274 = vmul.f32 %v1245, 1.442695
        %v1275 = vpow.pop %v1274
        %v1276 = vmul.f32 %v1246, 1.442695
        %v1277 = vpow.pop %v1276
        %v1278 = vmul.f32 %v1247, 1.442695
        %v1279 = vpow.pop %v1278
        %1280 = vadd.xlane.f32.xlu0 %v1249
        %v1281 = vpop.xlane.xlu0 %1280
        %1282 = vadd.xlane.f32.xlu0 %v1251
        %v1283 = vpop.xlane.xlu0 %1282
        %1284 = vadd.xlane.f32.xlu0 %v1253
        %v1285 = vpop.xlane.xlu0 %1284
        %1286 = vadd.xlane.f32.xlu0 %v1255
        %v1287 = vpop.xlane.xlu0 %1286
        %1288 = vadd.xlane.f32.xlu0 %v1257
        %v1289 = vpop.xlane.xlu0 %1288
        %1290 = vadd.xlane.f32.xlu0 %v1259
        %v1291 = vpop.xlane.xlu0 %1290
        %1292 = vadd.xlane.f32.xlu0 %v1261
        %v1293 = vpop.xlane.xlu0 %1292
        %1294 = vadd.xlane.f32.xlu0 %v1263
        %v1295 = vpop.xlane.xlu0 %1294
        %1296 = vadd.xlane.f32.xlu0 %v1265
        %v1297 = vpop.xlane.xlu0 %1296
        %1298 = vadd.xlane.f32.xlu0 %v1267
        %v1299 = vpop.xlane.xlu0 %1298
        %1300 = vadd.xlane.f32.xlu0 %v1269
        %v1301 = vpop.xlane.xlu0 %1300
        %1302 = vadd.xlane.f32.xlu0 %v1271
        %v1303 = vpop.xlane.xlu0 %1302
        %1304 = vadd.xlane.f32.xlu0 %v1273
        %v1305 = vpop.xlane.xlu0 %1304
        %1306 = vadd.xlane.f32.xlu0 %v1275
        %v1307 = vpop.xlane.xlu0 %1306
        %1308 = vadd.xlane.f32.xlu0 %v1277
        %v1309 = vpop.xlane.xlu0 %1308
        %1310 = vadd.xlane.f32.xlu0 %v1279
        %v1311 = vpop.xlane.xlu0 %1310
        %v1312 = vrcp.pop %v1281
        %v1313 = vrcp.pop %v1283
        %v1314 = vrcp.pop %v1285
        %v1315 = vrcp.pop %v1287
        %v1316 = vrcp.pop %v1289
        %v1317 = vrcp.pop %v1291
        %v1318 = vrcp.pop %v1293
        %v1319 = vrcp.pop %v1295
        %v1320 = vrcp.pop %v1297
        %v1321 = vrcp.pop %v1299
        %v1322 = vrcp.pop %v1301
        %v1323 = vrcp.pop %v1303
        %v1324 = vrcp.pop %v1305
        %v1325 = vrcp.pop %v1307
        %v1326 = vrcp.pop %v1309
        %v1327 = vrcp.pop %v1311
        %1344 = vrot.lane.b32.xlu0 %v473, 96
        %v1345 = vpop.permute.xlu0 %1344
        %1346 = vrot.lane.b32.xlu0 %v476, 96
        %v1347 = vpop.permute.xlu0 %1346
        %1348 = vrot.lane.b32.xlu0 %v479, 96
        %v1349 = vpop.permute.xlu0 %1348
        %1350 = vrot.lane.b32.xlu0 %v482, 96
        %v1351 = vpop.permute.xlu0 %1350
        %1352 = vrot.lane.b32.xlu0 %v485, 96
        %v1353 = vpop.permute.xlu0 %1352
        %1354 = vrot.lane.b32.xlu0 %v488, 96
        %v1355 = vpop.permute.xlu0 %1354
        %1356 = vrot.lane.b32.xlu0 %v491, 96
        %v1357 = vpop.permute.xlu0 %1356
        %1358 = vrot.lane.b32.xlu0 %v494, 96
        %v1359 = vpop.permute.xlu0 %1358
        %1360 = vrot.lane.b32.xlu0 %v497, 96
        %v1361 = vpop.permute.xlu0 %1360
        %1362 = vrot.lane.b32.xlu0 %v500, 96
        %v1363 = vpop.permute.xlu0 %1362
        %1364 = vrot.lane.b32.xlu0 %v503, 96
        %v1365 = vpop.permute.xlu0 %1364
        %1366 = vrot.lane.b32.xlu0 %v506, 96
        %v1367 = vpop.permute.xlu0 %1366
        %1368 = vrot.lane.b32.xlu0 %v509, 96
        %v1369 = vpop.permute.xlu0 %1368
        %1370 = vrot.lane.b32.xlu0 %v512, 96
        %v1371 = vpop.permute.xlu0 %1370
        %1372 = vrot.lane.b32.xlu0 %v515, 96
        %v1373 = vpop.permute.xlu0 %1372
        %1374 = vrot.lane.b32.xlu0 %v518, 96
        %v1375 = vpop.permute.xlu0 %1374
        %1392 = vmatpush.msra.mxu0 %v1375
        %1393 = vmatpush.msra.mxu0 %v1373
        %1394 = vmatpush.msra.mxu0 %v1371
        %1395 = vmatpush.msra.mxu0 %v1369
        %1396 = vmatpush.msra.mxu0 %v1367
        %1397 = vmatpush.msra.mxu0 %v1365
        %1398 = vmatpush.msra.mxu0 %v1363
        %1399 = vmatpush.msra.mxu0 %v1361
        %1400 = vmatpush.msra.mxu0 %v1359
        %1401 = vmatpush.msra.mxu0 %v1357
        %1402 = vmatpush.msra.mxu0 %v1355
        %1403 = vmatpush.msra.mxu0 %v1353
        %1404 = vmatpush.msra.mxu0 %v1351
        %1405 = vmatpush.msra.mxu0 %v1349
        %1406 = vmatpush.msra.mxu0 %v1347
        %1407 = vmatpush.msra.mxu0 %v1345
        %1408 = vmatmul.f32.gmra.mxu0 %v1249
        %v1409 = vpop.f32.mrf.mxu0
        %v1410 = vadd.f32 0.0, %v1409
        %1411 = vmatmul.f32.gmra.mxu0 %v1251
        %v1412 = vpop.f32.mrf.mxu0
        %v1413 = vadd.f32 0.0, %v1412
        %1414 = vmatmul.f32.gmra.mxu0 %v1253
        %v1415 = vpop.f32.mrf.mxu0
        %v1416 = vadd.f32 0.0, %v1415
        %1417 = vmatmul.f32.gmra.mxu0 %v1255
        %v1418 = vpop.f32.mrf.mxu0
        %v1419 = vadd.f32 0.0, %v1418
        %1420 = vmatmul.f32.gmra.mxu0 %v1257
        %v1421 = vpop.f32.mrf.mxu0
        %v1422 = vadd.f32 0.0, %v1421
        %1423 = vmatmul.f32.gmra.mxu0 %v1259
        %v1424 = vpop.f32.mrf.mxu0
        %v1425 = vadd.f32 0.0, %v1424
        %1426 = vmatmul.f32.gmra.mxu0 %v1261
        %v1427 = vpop.f32.mrf.mxu0
        %v1428 = vadd.f32 0.0, %v1427
        %1429 = vmatmul.f32.gmra.mxu0 %v1263
        %v1430 = vpop.f32.mrf.mxu0
        %v1431 = vadd.f32 0.0, %v1430
        %1432 = vmatmul.f32.gmra.mxu0 %v1265
        %v1433 = vpop.f32.mrf.mxu0
        %v1434 = vadd.f32 0.0, %v1433
        %1435 = vmatmul.f32.gmra.mxu0 %v1267
        %v1436 = vpop.f32.mrf.mxu0
        %v1437 = vadd.f32 0.0, %v1436
        %1438 = vmatmul.f32.gmra.mxu0 %v1269
        %v1439 = vpop.f32.mrf.mxu0
        %v1440 = vadd.f32 0.0, %v1439
        %1441 = vmatmul.f32.gmra.mxu0 %v1271
        %v1442 = vpop.f32.mrf.mxu0
        %v1443 = vadd.f32 0.0, %v1442
        %1444 = vmatmul.f32.gmra.mxu0 %v1273
        %v1445 = vpop.f32.mrf.mxu0
        %v1446 = vadd.f32 0.0, %v1445
        %1447 = vmatmul.f32.gmra.mxu0 %v1275
        %v1448 = vpop.f32.mrf.mxu0
        %v1449 = vadd.f32 0.0, %v1448
        %1450 = vmatmul.f32.gmra.mxu0 %v1277
        %v1451 = vpop.f32.mrf.mxu0
        %v1452 = vadd.f32 0.0, %v1451
        %1453 = vmatmul.f32.gmra.mxu0 %v1279
        %v1454 = vpop.f32.mrf.mxu0
        %v1455 = vadd.f32 0.0, %v1454
        %1456 = vdwg.mxu0
        %v1457 = vmul.f32 %v1410, %v1312
        %v1458 = vmul.f32 %v1413, %v1313
        %v1459 = vmul.f32 %v1416, %v1314
        %v1460 = vmul.f32 %v1419, %v1315
        %v1461 = vmul.f32 %v1422, %v1316
        %v1462 = vmul.f32 %v1425, %v1317
        %v1463 = vmul.f32 %v1428, %v1318
        %v1464 = vmul.f32 %v1431, %v1319
        %v1465 = vmul.f32 %v1434, %v1320
        %v1466 = vmul.f32 %v1437, %v1321
        %v1467 = vmul.f32 %v1440, %v1322
        %v1468 = vmul.f32 %v1443, %v1323
        %v1469 = vmul.f32 %v1446, %v1324
        %v1470 = vmul.f32 %v1449, %v1325
        %v1471 = vmul.f32 %v1452, %v1326
        %v1472 = vmul.f32 %v1455, %v1327
        %v1473 = vld [vmem:[%s4 + $0x20] sm:$0xff]
        %v1474 = vld [vmem:[%s4 + $0x28] sm:$0xff]
        %v1475 = vld [vmem:[%s4 + $0x30] sm:$0xff]
        %v1476 = vld [vmem:[%s4 + $0x38] sm:$0xff]
        %v1478 = vsel %vm536, %v1457, 0
        %v1481 = vsel %vm536, %v1458, 0
        %v1484 = vsel %vm536, %v1459, 0
        %v1487 = vsel %vm536, %v1460, 0
        %v1490 = vsel %vm536, %v1461, 0
        %v1493 = vsel %vm536, %v1462, 0
        %v1496 = vsel %vm536, %v1463, 0
        %v1499 = vsel %vm536, %v1464, 0
        %v1502 = vsel %vm536, %v1465, 0
        %v1505 = vsel %vm536, %v1466, 0
        %v1508 = vsel %vm536, %v1467, 0
        %v1511 = vsel %vm536, %v1468, 0
        %v1514 = vsel %vm536, %v1469, 0
        %v1517 = vsel %vm536, %v1470, 0
        %v1520 = vsel %vm536, %v1471, 0
        %v1523 = vsel %vm536, %v1472, 0
        %1525 = vmatpush.msra.mxu0 0.0
        %1526 = vmatpush.msra.mxu0 0.0
        %1527 = vmatpush.msra.mxu0 0.0
        %1528 = vmatpush.msra.mxu0 0.0
        %1529 = vmatpush.msra.mxu0 0.0
        %1530 = vmatpush.msra.mxu0 0.0
        %1531 = vmatpush.msra.mxu0 0.0
        %1532 = vmatpush.msra.mxu0 0.0
        %1533 = vmatpush.msra.mxu0 0.0
        %1534 = vmatpush.msra.mxu0 0.0
        %1535 = vmatpush.msra.mxu0 0.0
        %1536 = vmatpush.msra.mxu0 0.0
        %1537 = vmatpush.msra.mxu0 %v1476
        %1538 = vmatpush.msra.mxu0 %v1475
        %1539 = vmatpush.msra.mxu0 %v1474
        %1540 = vmatpush.msra.mxu0 %v1473
        %1541 = vmatmul.f32.gmra.mxu0 %v1478
        %v1542 = vpop.f32.mrf.mxu0
        %v1543 = vadd.f32 0.0, %v1542
        %1544 = vmatmul.f32.gmra.mxu0 %v1481
        %v1545 = vpop.f32.mrf.mxu0
        %v1546 = vadd.f32 0.0, %v1545
        %1547 = vmatmul.f32.gmra.mxu0 %v1484
        %v1548 = vpop.f32.mrf.mxu0
        %v1549 = vadd.f32 0.0, %v1548
        %1550 = vmatmul.f32.gmra.mxu0 %v1487
        %v1551 = vpop.f32.mrf.mxu0
        %v1552 = vadd.f32 0.0, %v1551
        %1553 = vmatmul.f32.gmra.mxu0 %v1490
        %v1554 = vpop.f32.mrf.mxu0
        %v1555 = vadd.f32 0.0, %v1554
        %1556 = vmatmul.f32.gmra.mxu0 %v1493
        %v1557 = vpop.f32.mrf.mxu0
        %v1558 = vadd.f32 0.0, %v1557
        %1559 = vmatmul.f32.gmra.mxu0 %v1496
        %v1560 = vpop.f32.mrf.mxu0
        %v1561 = vadd.f32 0.0, %v1560
        %1562 = vmatmul.f32.gmra.mxu0 %v1499
        %v1563 = vpop.f32.mrf.mxu0
        %v1564 = vadd.f32 0.0, %v1563
        %1565 = vmatmul.f32.gmra.mxu0 %v1502
        %v1566 = vpop.f32.mrf.mxu0
        %v1567 = vadd.f32 0.0, %v1566
        %1568 = vmatmul.f32.gmra.mxu0 %v1505
        %v1569 = vpop.f32.mrf.mxu0
        %v1570 = vadd.f32 0.0, %v1569
        %1571 = vmatmul.f32.gmra.mxu0 %v1508
        %v1572 = vpop.f32.mrf.mxu0
        %v1573 = vadd.f32 0.0, %v1572
        %1574 = vmatmul.f32.gmra.mxu0 %v1511
        %v1575 = vpop.f32.mrf.mxu0
        %v1576 = vadd.f32 0.0, %v1575
        %1577 = vmatmul.f32.gmra.mxu0 %v1514
        %v1578 = vpop.f32.mrf.mxu0
        %v1579 = vadd.f32 0.0, %v1578
        %1580 = vmatmul.f32.gmra.mxu0 %v1517
        %v1581 = vpop.f32.mrf.mxu0
        %v1582 = vadd.f32 0.0, %v1581
        %1583 = vmatmul.f32.gmra.mxu0 %v1520
        %v1584 = vpop.f32.mrf.mxu0
        %v1585 = vadd.f32 0.0, %v1584
        %1586 = vmatmul.f32.gmra.mxu0 %v1523
        %v1587 = vpop.f32.mrf.mxu0
        %v1588 = vadd.f32 0.0, %v1587
        %1589 = vdwg.mxu0
        %v1591 = vsel %vm536, %v939, 0
        %v1594 = vsel %vm536, %v940, 0
        %v1597 = vsel %vm536, %v941, 0
        %v1600 = vsel %vm536, %v942, 0
        %v1603 = vsel %vm536, %v943, 0
        %v1606 = vsel %vm536, %v944, 0
        %v1609 = vsel %vm536, %v945, 0
        %v1612 = vsel %vm536, %v946, 0
        %v1615 = vsel %vm536, %v947, 0
        %v1618 = vsel %vm536, %v948, 0
        %v1621 = vsel %vm536, %v949, 0
        %v1624 = vsel %vm536, %v950, 0
        %v1627 = vsel %vm536, %v951, 0
        %v1630 = vsel %vm536, %v952, 0
        %v1633 = vsel %vm536, %v953, 0
        %v1636 = vsel %vm536, %v954, 0
        %1638 = vmatpush.msra.mxu0 0.0
        %1639 = vmatpush.msra.mxu0 0.0
        %1640 = vmatpush.msra.mxu0 0.0
        %1641 = vmatpush.msra.mxu0 0.0
        %1642 = vmatpush.msra.mxu0 0.0
        %1643 = vmatpush.msra.mxu0 0.0
        %1644 = vmatpush.msra.mxu0 0.0
        %1645 = vmatpush.msra.mxu0 0.0
        %1646 = vmatpush.msra.mxu0 0.0
        %1647 = vmatpush.msra.mxu0 0.0
        %1648 = vmatpush.msra.mxu0 0.0
        %1649 = vmatpush.msra.mxu0 0.0
        %1650 = vmatpush.msra.mxu0 %v958
        %1651 = vmatpush.msra.mxu0 %v957
        %1652 = vmatpush.msra.mxu0 %v956
        %1653 = vmatpush.msra.mxu0 %v955
        %1654 = vmatmul.f32.gmra.mxu0 %v1591
        %v1655 = vpop.f32.mrf.mxu0
        %v1656 = vadd.f32 %v1543, %v1655
        %1657 = vmatmul.f32.gmra.mxu0 %v1594
        %v1658 = vpop.f32.mrf.mxu0
        %v1659 = vadd.f32 %v1546, %v1658
        %1660 = vmatmul.f32.gmra.mxu0 %v1597
        %v1661 = vpop.f32.mrf.mxu0
        %v1662 = vadd.f32 %v1549, %v1661
        %1663 = vmatmul.f32.gmra.mxu0 %v1600
        %v1664 = vpop.f32.mrf.mxu0
        %v1665 = vadd.f32 %v1552, %v1664
        %1666 = vmatmul.f32.gmra.mxu0 %v1603
        %v1667 = vpop.f32.mrf.mxu0
        %v1668 = vadd.f32 %v1555, %v1667
        %1669 = vmatmul.f32.gmra.mxu0 %v1606
        %v1670 = vpop.f32.mrf.mxu0
        %v1671 = vadd.f32 %v1558, %v1670
        %1672 = vmatmul.f32.gmra.mxu0 %v1609
        %v1673 = vpop.f32.mrf.mxu0
        %v1674 = vadd.f32 %v1561, %v1673
        %1675 = vmatmul.f32.gmra.mxu0 %v1612
        %v1676 = vpop.f32.mrf.mxu0
        %v1677 = vadd.f32 %v1564, %v1676
        %1678 = vmatmul.f32.gmra.mxu0 %v1615
        %v1679 = vpop.f32.mrf.mxu0
        %v1680 = vadd.f32 %v1567, %v1679
        %1681 = vmatmul.f32.gmra.mxu0 %v1618
        %v1682 = vpop.f32.mrf.mxu0
        %v1683 = vadd.f32 %v1570, %v1682
        %1684 = vmatmul.f32.gmra.mxu0 %v1621
        %v1685 = vpop.f32.mrf.mxu0
        %v1686 = vadd.f32 %v1573, %v1685
        %1687 = vmatmul.f32.gmra.mxu0 %v1624
        %v1688 = vpop.f32.mrf.mxu0
        %v1689 = vadd.f32 %v1576, %v1688
        %1690 = vmatmul.f32.gmra.mxu0 %v1627
        %v1691 = vpop.f32.mrf.mxu0
        %v1692 = vadd.f32 %v1579, %v1691
        %1693 = vmatmul.f32.gmra.mxu0 %v1630
        %v1694 = vpop.f32.mrf.mxu0
        %v1695 = vadd.f32 %v1582, %v1694
        %1696 = vmatmul.f32.gmra.mxu0 %v1633
        %v1697 = vpop.f32.mrf.mxu0
        %v1698 = vadd.f32 %v1585, %v1697
        %1699 = vmatmul.f32.gmra.mxu0 %v1636
        %v1700 = vpop.f32.mrf.mxu0
        %v1701 = vadd.f32 %v1588, %v1700
        %1702 = vdwg.mxu0
        %1703 = vrot.lane.b32.xlu0 %v343, 64
        %v1704 = vpop.permute.xlu0 %1703
        %1705 = vrot.lane.b32.xlu0 %v346, 64
        %v1706 = vpop.permute.xlu0 %1705
        %1707 = vrot.lane.b32.xlu0 %v349, 64
        %v1708 = vpop.permute.xlu0 %1707
        %1709 = vrot.lane.b32.xlu0 %v352, 64
        %v1710 = vpop.permute.xlu0 %1709
        %1711 = vrot.lane.b32.xlu0 %v355, 64
        %v1712 = vpop.permute.xlu0 %1711
        %1713 = vrot.lane.b32.xlu0 %v358, 64
        %v1714 = vpop.permute.xlu0 %1713
        %1715 = vrot.lane.b32.xlu0 %v361, 64
        %v1716 = vpop.permute.xlu0 %1715
        %1717 = vrot.lane.b32.xlu0 %v364, 64
        %v1718 = vpop.permute.xlu0 %1717
        %1719 = vrot.lane.b32.xlu0 %v367, 64
        %v1720 = vpop.permute.xlu0 %1719
        %1721 = vrot.lane.b32.xlu0 %v370, 64
        %v1722 = vpop.permute.xlu0 %1721
        %1723 = vrot.lane.b32.xlu0 %v373, 64
        %v1724 = vpop.permute.xlu0 %1723
        %1725 = vrot.lane.b32.xlu0 %v376, 64
        %v1726 = vpop.permute.xlu0 %1725
        %1727 = vrot.lane.b32.xlu0 %v379, 64
        %v1728 = vpop.permute.xlu0 %1727
        %1729 = vrot.lane.b32.xlu0 %v382, 64
        %v1730 = vpop.permute.xlu0 %1729
        %1731 = vrot.lane.b32.xlu0 %v385, 64
        %v1732 = vpop.permute.xlu0 %1731
        %1733 = vrot.lane.b32.xlu0 %v388, 64
        %v1734 = vpop.permute.xlu0 %1733
        %1735 = vrot.lane.b32.xlu0 %v408, 64
        %v1736 = vpop.permute.xlu0 %1735
        %1737 = vrot.lane.b32.xlu0 %v411, 64
        %v1738 = vpop.permute.xlu0 %1737
        %1739 = vrot.lane.b32.xlu0 %v414, 64
        %v1740 = vpop.permute.xlu0 %1739
        %1741 = vrot.lane.b32.xlu0 %v417, 64
        %v1742 = vpop.permute.xlu0 %1741
        %1743 = vrot.lane.b32.xlu0 %v420, 64
        %v1744 = vpop.permute.xlu0 %1743
        %1745 = vrot.lane.b32.xlu0 %v423, 64
        %v1746 = vpop.permute.xlu0 %1745
        %1747 = vrot.lane.b32.xlu0 %v426, 64
        %v1748 = vpop.permute.xlu0 %1747
        %1749 = vrot.lane.b32.xlu0 %v429, 64
        %v1750 = vpop.permute.xlu0 %1749
        %1751 = vrot.lane.b32.xlu0 %v432, 64
        %v1752 = vpop.permute.xlu0 %1751
        %1753 = vrot.lane.b32.xlu0 %v435, 64
        %v1754 = vpop.permute.xlu0 %1753
        %1755 = vrot.lane.b32.xlu0 %v438, 64
        %v1756 = vpop.permute.xlu0 %1755
        %1757 = vrot.lane.b32.xlu0 %v441, 64
        %v1758 = vpop.permute.xlu0 %1757
        %1759 = vrot.lane.b32.xlu0 %v444, 64
        %v1760 = vpop.permute.xlu0 %1759
        %1761 = vrot.lane.b32.xlu0 %v447, 64
        %v1762 = vpop.permute.xlu0 %1761
        %1763 = vrot.lane.b32.xlu0 %v450, 64
        %v1764 = vpop.permute.xlu0 %1763
        %1765 = vrot.lane.b32.xlu0 %v453, 64
        %v1766 = vpop.permute.xlu0 %1765
        %v1767 = vsel %vm536, %v1704, 0
        %v1769 = vsel %vm536, %v1706, 0
        %v1771 = vsel %vm536, %v1708, 0
        %v1773 = vsel %vm536, %v1710, 0
        %v1775 = vsel %vm536, %v1712, 0
        %v1777 = vsel %vm536, %v1714, 0
        %v1779 = vsel %vm536, %v1716, 0
        %v1781 = vsel %vm536, %v1718, 0
        %v1783 = vsel %vm536, %v1720, 0
        %v1785 = vsel %vm536, %v1722, 0
        %v1787 = vsel %vm536, %v1724, 0
        %v1789 = vsel %vm536, %v1726, 0
        %v1791 = vsel %vm536, %v1728, 0
        %v1793 = vsel %vm536, %v1730, 0
        %v1795 = vsel %vm536, %v1732, 0
        %v1797 = vsel %vm536, %v1734, 0
        %v1799 = vsel %vm536, %v1736, 0
        %v1801 = vsel %vm536, %v1738, 0
        %v1803 = vsel %vm536, %v1740, 0
        %v1805 = vsel %vm536, %v1742, 0
        %v1807 = vsel %vm536, %v1744, 0
        %v1809 = vsel %vm536, %v1746, 0
        %v1811 = vsel %vm536, %v1748, 0
        %v1813 = vsel %vm536, %v1750, 0
        %v1815 = vsel %vm536, %v1752, 0
        %v1817 = vsel %vm536, %v1754, 0
        %v1819 = vsel %vm536, %v1756, 0
        %v1821 = vsel %vm536, %v1758, 0
        %v1823 = vsel %vm536, %v1760, 0
        %v1825 = vsel %vm536, %v1762, 0
        %v1827 = vsel %vm536, %v1764, 0
        %v1829 = vsel %vm536, %v1766, 0
        %1831 = vmatpush.xpose.msra.mxu0 %v1829
        %1832 = vmatpush.xpose.msra.mxu0 %v1827
        %1833 = vmatpush.xpose.msra.mxu0 %v1825
        %1834 = vmatpush.xpose.msra.mxu0 %v1823
        %1835 = vmatpush.xpose.msra.mxu0 %v1821
        %1836 = vmatpush.xpose.msra.mxu0 %v1819
        %1837 = vmatpush.xpose.msra.mxu0 %v1817
        %1838 = vmatpush.xpose.msra.mxu0 %v1815
        %1839 = vmatpush.xpose.msra.mxu0 %v1813
        %1840 = vmatpush.xpose.msra.mxu0 %v1811
        %1841 = vmatpush.xpose.msra.mxu0 %v1809
        %1842 = vmatpush.xpose.msra.mxu0 %v1807
        %1843 = vmatpush.xpose.msra.mxu0 %v1805
        %1844 = vmatpush.xpose.msra.mxu0 %v1803
        %1845 = vmatpush.xpose.msra.mxu0 %v1801
        %1846 = vmatpush.xpose.msra.mxu0 %v1799
        %1847 = vmatmul.f32.gmra.mxu0 %v1767
        %v1848 = vpop.f32.mrf.mxu0
        %v1849 = vadd.f32 0.0, %v1848
        %1850 = vmatmul.f32.gmra.mxu0 %v1769
        %v1851 = vpop.f32.mrf.mxu0
        %v1852 = vadd.f32 0.0, %v1851
        %1853 = vmatmul.f32.gmra.mxu0 %v1771
        %v1854 = vpop.f32.mrf.mxu0
        %v1855 = vadd.f32 0.0, %v1854
        %1856 = vmatmul.f32.gmra.mxu0 %v1773
        %v1857 = vpop.f32.mrf.mxu0
        %v1858 = vadd.f32 0.0, %v1857
        %1859 = vmatmul.f32.gmra.mxu0 %v1775
        %v1860 = vpop.f32.mrf.mxu0
        %v1861 = vadd.f32 0.0, %v1860
        %1862 = vmatmul.f32.gmra.mxu0 %v1777
        %v1863 = vpop.f32.mrf.mxu0
        %v1864 = vadd.f32 0.0, %v1863
        %1865 = vmatmul.f32.gmra.mxu0 %v1779
        %v1866 = vpop.f32.mrf.mxu0
        %v1867 = vadd.f32 0.0, %v1866
        %1868 = vmatmul.f32.gmra.mxu0 %v1781
        %v1869 = vpop.f32.mrf.mxu0
        %v1870 = vadd.f32 0.0, %v1869
        %1871 = vmatmul.f32.gmra.mxu0 %v1783
        %v1872 = vpop.f32.mrf.mxu0
        %v1873 = vadd.f32 0.0, %v1872
        %1874 = vmatmul.f32.gmra.mxu0 %v1785
        %v1875 = vpop.f32.mrf.mxu0
        %v1876 = vadd.f32 0.0, %v1875
        %1877 = vmatmul.f32.gmra.mxu0 %v1787
        %v1878 = vpop.f32.mrf.mxu0
        %v1879 = vadd.f32 0.0, %v1878
        %1880 = vmatmul.f32.gmra.mxu0 %v1789
        %v1881 = vpop.f32.mrf.mxu0
        %v1882 = vadd.f32 0.0, %v1881
        %1883 = vmatmul.f32.gmra.mxu0 %v1791
        %v1884 = vpop.f32.mrf.mxu0
        %v1885 = vadd.f32 0.0, %v1884
        %1886 = vmatmul.f32.gmra.mxu0 %v1793
        %v1887 = vpop.f32.mrf.mxu0
        %v1888 = vadd.f32 0.0, %v1887
        %1889 = vmatmul.f32.gmra.mxu0 %v1795
        %v1890 = vpop.f32.mrf.mxu0
        %v1891 = vadd.f32 0.0, %v1890
        %1892 = vmatmul.f32.gmra.mxu0 %v1797
        %v1893 = vpop.f32.mrf.mxu0
        %v1894 = vadd.f32 0.0, %v1893
        %1895 = vdwg.mxu0
        %v1896 = vmul.f32 %v1849, 0.088388346
        %v1897 = vmul.f32 %v1852, 0.088388346
        %v1898 = vmul.f32 %v1855, 0.088388346
        %v1899 = vmul.f32 %v1858, 0.088388346
        %v1900 = vmul.f32 %v1861, 0.088388346
        %v1901 = vmul.f32 %v1864, 0.088388346
        %v1902 = vmul.f32 %v1867, 0.088388346
        %v1903 = vmul.f32 %v1870, 0.088388346
        %v1904 = vmul.f32 %v1873, 0.088388346
        %v1905 = vmul.f32 %v1876, 0.088388346
        %v1906 = vmul.f32 %v1879, 0.088388346
        %v1907 = vmul.f32 %v1882, 0.088388346
        %v1908 = vmul.f32 %v1885, 0.088388346
        %v1909 = vmul.f32 %v1888, 0.088388346
        %v1910 = vmul.f32 %v1891, 0.088388346
        %v1911 = vmul.f32 %v1894, 0.088388346
        %v1912 = vfloor.f32 %v1896
        %v1913 = vfloor.f32 %v1897
        %v1914 = vfloor.f32 %v1898
        %v1915 = vfloor.f32 %v1899
        %v1916 = vfloor.f32 %v1900
        %v1917 = vfloor.f32 %v1901
        %v1918 = vfloor.f32 %v1902
        %v1919 = vfloor.f32 %v1903
        %v1920 = vfloor.f32 %v1904
        %v1921 = vfloor.f32 %v1905
        %v1922 = vfloor.f32 %v1906
        %v1923 = vfloor.f32 %v1907
        %v1924 = vfloor.f32 %v1908
        %v1925 = vfloor.f32 %v1909
        %v1926 = vfloor.f32 %v1910
        %v1927 = vfloor.f32 %v1911
        %v1928 = vadd.f32 %v1912, %v520
        %v1929 = vadd.f32 %v1913, %v521
        %v1930 = vadd.f32 %v1914, %v522
        %v1931 = vadd.f32 %v1915, %v523
        %v1932 = vadd.f32 %v1916, %v524
        %v1933 = vadd.f32 %v1917, %v525
        %v1934 = vadd.f32 %v1918, %v526
        %v1935 = vadd.f32 %v1919, %v527
        %v1936 = vadd.f32 %v1920, %v528
        %v1937 = vadd.f32 %v1921, %v529
        %v1938 = vadd.f32 %v1922, %v530
        %v1939 = vadd.f32 %v1923, %v531
        %v1940 = vadd.f32 %v1924, %v532
        %v1941 = vadd.f32 %v1925, %v533
        %v1942 = vadd.f32 %v1926, %v534
        %v1943 = vadd.f32 %v1927, %v535
        %1944 = vmax.xlane.f32.xlu0 %v1928
        %v1945 = vpop.xlane.xlu0 %1944
        %1946 = vmax.xlane.f32.xlu0 %v1929
        %v1947 = vpop.xlane.xlu0 %1946
        %1948 = vmax.xlane.f32.xlu0 %v1930
        %v1949 = vpop.xlane.xlu0 %1948
        %1950 = vmax.xlane.f32.xlu0 %v1931
        %v1951 = vpop.xlane.xlu0 %1950
        %1952 = vmax.xlane.f32.xlu0 %v1932
        %v1953 = vpop.xlane.xlu0 %1952
        %1954 = vmax.xlane.f32.xlu0 %v1933
        %v1955 = vpop.xlane.xlu0 %1954
        %1956 = vmax.xlane.f32.xlu0 %v1934
        %v1957 = vpop.xlane.xlu0 %1956
        %1958 = vmax.xlane.f32.xlu0 %v1935
        %v1959 = vpop.xlane.xlu0 %1958
        %1960 = vmax.xlane.f32.xlu0 %v1936
        %v1961 = vpop.xlane.xlu0 %1960
        %1962 = vmax.xlane.f32.xlu0 %v1937
        %v1963 = vpop.xlane.xlu0 %1962
        %1964 = vmax.xlane.f32.xlu0 %v1938
        %v1965 = vpop.xlane.xlu0 %1964
        %1966 = vmax.xlane.f32.xlu0 %v1939
        %v1967 = vpop.xlane.xlu0 %1966
        %1968 = vmax.xlane.f32.xlu0 %v1940
        %v1969 = vpop.xlane.xlu0 %1968
        %1970 = vmax.xlane.f32.xlu0 %v1941
        %v1971 = vpop.xlane.xlu0 %1970
        %1972 = vmax.xlane.f32.xlu0 %v1942
        %v1973 = vpop.xlane.xlu0 %1972
        %1974 = vmax.xlane.f32.xlu0 %v1943
        %v1975 = vpop.xlane.xlu0 %1974
        %v1976 = vsub.f32 %v1928, %v1945
        %v1977 = vsub.f32 %v1929, %v1947
        %v1978 = vsub.f32 %v1930, %v1949
        %v1979 = vsub.f32 %v1931, %v1951
        %v1980 = vsub.f32 %v1932, %v1953
        %v1981 = vsub.f32 %v1933, %v1955
        %v1982 = vsub.f32 %v1934, %v1957
        %v1983 = vsub.f32 %v1935, %v1959
        %v1984 = vsub.f32 %v1936, %v1961
        %v1985 = vsub.f32 %v1937, %v1963
        %v1986 = vsub.f32 %v1938, %v1965
        %v1987 = vsub.f32 %v1939, %v1967
        %v1988 = vsub.f32 %v1940, %v1969
        %v1989 = vsub.f32 %v1941, %v1971
        %v1990 = vsub.f32 %v1942, %v1973
        %v1991 = vsub.f32 %v1943, %v1975
        %v1992 = vmul.f32 %v1976, 1.442695
        %v1993 = vpow.pop %v1992
        %v1994 = vmul.f32 %v1977, 1.442695
        %v1995 = vpow.pop %v1994
        %v1996 = vmul.f32 %v1978, 1.442695
        %v1997 = vpow.pop %v1996
        %v1998 = vmul.f32 %v1979, 1.442695
        %v1999 = vpow.pop %v1998
        %v2000 = vmul.f32 %v1980, 1.442695
        %v2001 = vpow.pop %v2000
        %v2002 = vmul.f32 %v1981, 1.442695
        %v2003 = vpow.pop %v2002
        %v2004 = vmul.f32 %v1982, 1.442695
        %v2005 = vpow.pop %v2004
        %v2006 = vmul.f32 %v1983, 1.442695
        %v2007 = vpow.pop %v2006
        %v2008 = vmul.f32 %v1984, 1.442695
        %v2009 = vpow.pop %v2008
        %v2010 = vmul.f32 %v1985, 1.442695
        %v2011 = vpow.pop %v2010
        %v2012 = vmul.f32 %v1986, 1.442695
        %v2013 = vpow.pop %v2012
        %v2014 = vmul.f32 %v1987, 1.442695
        %v2015 = vpow.pop %v2014
        %v2016 = vmul.f32 %v1988, 1.442695
        %v2017 = vpow.pop %v2016
        %v2018 = vmul.f32 %v1989, 1.442695
        %v2019 = vpow.pop %v2018
        %v2020 = vmul.f32 %v1990, 1.442695
        %v2021 = vpow.pop %v2020
        %v2022 = vmul.f32 %v1991, 1.442695
        %v2023 = vpow.pop %v2022
        %2024 = vadd.xlane.f32.xlu0 %v1993
        %v2025 = vpop.xlane.xlu0 %2024
        %2026 = vadd.xlane.f32.xlu0 %v1995
        %v2027 = vpop.xlane.xlu0 %2026
        %2028 = vadd.xlane.f32.xlu0 %v1997
        %v2029 = vpop.xlane.xlu0 %2028
        %2030 = vadd.xlane.f32.xlu0 %v1999
        %v2031 = vpop.xlane.xlu0 %2030
        %2032 = vadd.xlane.f32.xlu0 %v2001
        %v2033 = vpop.xlane.xlu0 %2032
        %2034 = vadd.xlane.f32.xlu0 %v2003
        %v2035 = vpop.xlane.xlu0 %2034
        %2036 = vadd.xlane.f32.xlu0 %v2005
        %v2037 = vpop.xlane.xlu0 %2036
        %2038 = vadd.xlane.f32.xlu0 %v2007
        %v2039 = vpop.xlane.xlu0 %2038
        %2040 = vadd.xlane.f32.xlu0 %v2009
        %v2041 = vpop.xlane.xlu0 %2040
        %2042 = vadd.xlane.f32.xlu0 %v2011
        %v2043 = vpop.xlane.xlu0 %2042
        %2044 = vadd.xlane.f32.xlu0 %v2013
        %v2045 = vpop.xlane.xlu0 %2044
        %2046 = vadd.xlane.f32.xlu0 %v2015
        %v2047 = vpop.xlane.xlu0 %2046
        %2048 = vadd.xlane.f32.xlu0 %v2017
        %v2049 = vpop.xlane.xlu0 %2048
        %2050 = vadd.xlane.f32.xlu0 %v2019
        %v2051 = vpop.xlane.xlu0 %2050
        %2052 = vadd.xlane.f32.xlu0 %v2021
        %v2053 = vpop.xlane.xlu0 %2052
        %2054 = vadd.xlane.f32.xlu0 %v2023
        %v2055 = vpop.xlane.xlu0 %2054
        %v2056 = vrcp.pop %v2025
        %v2057 = vrcp.pop %v2027
        %v2058 = vrcp.pop %v2029
        %v2059 = vrcp.pop %v2031
        %v2060 = vrcp.pop %v2033
        %v2061 = vrcp.pop %v2035
        %v2062 = vrcp.pop %v2037
        %v2063 = vrcp.pop %v2039
        %v2064 = vrcp.pop %v2041
        %v2065 = vrcp.pop %v2043
        %v2066 = vrcp.pop %v2045
        %v2067 = vrcp.pop %v2047
        %v2068 = vrcp.pop %v2049
        %v2069 = vrcp.pop %v2051
        %v2070 = vrcp.pop %v2053
        %v2071 = vrcp.pop %v2055
        %2072 = vrot.lane.b32.xlu0 %v473, 64
        %v2073 = vpop.permute.xlu0 %2072
        %2074 = vrot.lane.b32.xlu0 %v476, 64
        %v2075 = vpop.permute.xlu0 %2074
        %2076 = vrot.lane.b32.xlu0 %v479, 64
        %v2077 = vpop.permute.xlu0 %2076
        %2078 = vrot.lane.b32.xlu0 %v482, 64
        %v2079 = vpop.permute.xlu0 %2078
        %2080 = vrot.lane.b32.xlu0 %v485, 64
        %v2081 = vpop.permute.xlu0 %2080
        %2082 = vrot.lane.b32.xlu0 %v488, 64
        %v2083 = vpop.permute.xlu0 %2082
        %2084 = vrot.lane.b32.xlu0 %v491, 64
        %v2085 = vpop.permute.xlu0 %2084
        %2086 = vrot.lane.b32.xlu0 %v494, 64
        %v2087 = vpop.permute.xlu0 %2086
        %2088 = vrot.lane.b32.xlu0 %v497, 64
        %v2089 = vpop.permute.xlu0 %2088
        %2090 = vrot.lane.b32.xlu0 %v500, 64
        %v2091 = vpop.permute.xlu0 %2090
        %2092 = vrot.lane.b32.xlu0 %v503, 64
        %v2093 = vpop.permute.xlu0 %2092
        %2094 = vrot.lane.b32.xlu0 %v506, 64
        %v2095 = vpop.permute.xlu0 %2094
        %2096 = vrot.lane.b32.xlu0 %v509, 64
        %v2097 = vpop.permute.xlu0 %2096
        %2098 = vrot.lane.b32.xlu0 %v512, 64
        %v2099 = vpop.permute.xlu0 %2098
        %2100 = vrot.lane.b32.xlu0 %v515, 64
        %v2101 = vpop.permute.xlu0 %2100
        %2102 = vrot.lane.b32.xlu0 %v518, 64
        %v2103 = vpop.permute.xlu0 %2102
        %2120 = vmatpush.msra.mxu0 %v2103
        %2121 = vmatpush.msra.mxu0 %v2101
        %2122 = vmatpush.msra.mxu0 %v2099
        %2123 = vmatpush.msra.mxu0 %v2097
        %2124 = vmatpush.msra.mxu0 %v2095
        %2125 = vmatpush.msra.mxu0 %v2093
        %2126 = vmatpush.msra.mxu0 %v2091
        %2127 = vmatpush.msra.mxu0 %v2089
        %2128 = vmatpush.msra.mxu0 %v2087
        %2129 = vmatpush.msra.mxu0 %v2085
        %2130 = vmatpush.msra.mxu0 %v2083
        %2131 = vmatpush.msra.mxu0 %v2081
        %2132 = vmatpush.msra.mxu0 %v2079
        %2133 = vmatpush.msra.mxu0 %v2077
        %2134 = vmatpush.msra.mxu0 %v2075
        %2135 = vmatpush.msra.mxu0 %v2073
        %2136 = vmatmul.f32.gmra.mxu0 %v1993
        %v2137 = vpop.f32.mrf.mxu0
        %v2138 = vadd.f32 0.0, %v2137
        %2139 = vmatmul.f32.gmra.mxu0 %v1995
        %v2140 = vpop.f32.mrf.mxu0
        %v2141 = vadd.f32 0.0, %v2140
        %2142 = vmatmul.f32.gmra.mxu0 %v1997
        %v2143 = vpop.f32.mrf.mxu0
        %v2144 = vadd.f32 0.0, %v2143
        %2145 = vmatmul.f32.gmra.mxu0 %v1999
        %v2146 = vpop.f32.mrf.mxu0
        %v2147 = vadd.f32 0.0, %v2146
        %2148 = vmatmul.f32.gmra.mxu0 %v2001
        %v2149 = vpop.f32.mrf.mxu0
        %v2150 = vadd.f32 0.0, %v2149
        %2151 = vmatmul.f32.gmra.mxu0 %v2003
        %v2152 = vpop.f32.mrf.mxu0
        %v2153 = vadd.f32 0.0, %v2152
        %2154 = vmatmul.f32.gmra.mxu0 %v2005
        %v2155 = vpop.f32.mrf.mxu0
        %v2156 = vadd.f32 0.0, %v2155
        %2157 = vmatmul.f32.gmra.mxu0 %v2007
        %v2158 = vpop.f32.mrf.mxu0
        %v2159 = vadd.f32 0.0, %v2158
        %2160 = vmatmul.f32.gmra.mxu0 %v2009
        %v2161 = vpop.f32.mrf.mxu0
        %v2162 = vadd.f32 0.0, %v2161
        %2163 = vmatmul.f32.gmra.mxu0 %v2011
        %v2164 = vpop.f32.mrf.mxu0
        %v2165 = vadd.f32 0.0, %v2164
        %2166 = vmatmul.f32.gmra.mxu0 %v2013
        %v2167 = vpop.f32.mrf.mxu0
        %v2168 = vadd.f32 0.0, %v2167
        %2169 = vmatmul.f32.gmra.mxu0 %v2015
        %v2170 = vpop.f32.mrf.mxu0
        %v2171 = vadd.f32 0.0, %v2170
        %2172 = vmatmul.f32.gmra.mxu0 %v2017
        %v2173 = vpop.f32.mrf.mxu0
        %v2174 = vadd.f32 0.0, %v2173
        %2175 = vmatmul.f32.gmra.mxu0 %v2019
        %v2176 = vpop.f32.mrf.mxu0
        %v2177 = vadd.f32 0.0, %v2176
        %2178 = vmatmul.f32.gmra.mxu0 %v2021
        %v2179 = vpop.f32.mrf.mxu0
        %v2180 = vadd.f32 0.0, %v2179
        %2181 = vmatmul.f32.gmra.mxu0 %v2023
        %v2182 = vpop.f32.mrf.mxu0
        %v2183 = vadd.f32 0.0, %v2182
        %2184 = vdwg.mxu0
        %v2185 = vmul.f32 %v2138, %v2056
        %v2186 = vmul.f32 %v2141, %v2057
        %v2187 = vmul.f32 %v2144, %v2058
        %v2188 = vmul.f32 %v2147, %v2059
        %v2189 = vmul.f32 %v2150, %v2060
        %v2190 = vmul.f32 %v2153, %v2061
        %v2191 = vmul.f32 %v2156, %v2062
        %v2192 = vmul.f32 %v2159, %v2063
        %v2193 = vmul.f32 %v2162, %v2064
        %v2194 = vmul.f32 %v2165, %v2065
        %v2195 = vmul.f32 %v2168, %v2066
        %v2196 = vmul.f32 %v2171, %v2067
        %v2197 = vmul.f32 %v2174, %v2068
        %v2198 = vmul.f32 %v2177, %v2069
        %v2199 = vmul.f32 %v2180, %v2070
        %v2200 = vmul.f32 %v2183, %v2071
        %v2201 = vld [vmem:[%s4 + $0x40] sm:$0xff]
        %v2202 = vld [vmem:[%s4 + $0x48] sm:$0xff]
        %v2203 = vld [vmem:[%s4 + $0x50] sm:$0xff]
        %v2204 = vld [vmem:[%s4 + $0x58] sm:$0xff]
        %v2206 = vsel %vm536, %v2185, 0
        %v2209 = vsel %vm536, %v2186, 0
        %v2212 = vsel %vm536, %v2187, 0
        %v2215 = vsel %vm536, %v2188, 0
        %v2218 = vsel %vm536, %v2189, 0
        %v2221 = vsel %vm536, %v2190, 0
        %v2224 = vsel %vm536, %v2191, 0
        %v2227 = vsel %vm536, %v2192, 0
        %v2230 = vsel %vm536, %v2193, 0
        %v2233 = vsel %vm536, %v2194, 0
        %v2236 = vsel %vm536, %v2195, 0
        %v2239 = vsel %vm536, %v2196, 0
        %v2242 = vsel %vm536, %v2197, 0
        %v2245 = vsel %vm536, %v2198, 0
        %v2248 = vsel %vm536, %v2199, 0
        %v2251 = vsel %vm536, %v2200, 0
        %2253 = vmatpush.msra.mxu0 0.0
        %2254 = vmatpush.msra.mxu0 0.0
        %2255 = vmatpush.msra.mxu0 0.0
        %2256 = vmatpush.msra.mxu0 0.0
        %2257 = vmatpush.msra.mxu0 0.0
        %2258 = vmatpush.msra.mxu0 0.0
        %2259 = vmatpush.msra.mxu0 0.0
        %2260 = vmatpush.msra.mxu0 0.0
        %2261 = vmatpush.msra.mxu0 0.0
        %2262 = vmatpush.msra.mxu0 0.0
        %2263 = vmatpush.msra.mxu0 0.0
        %2264 = vmatpush.msra.mxu0 0.0
        %2265 = vmatpush.msra.mxu0 %v2204
        %2266 = vmatpush.msra.mxu0 %v2203
        %2267 = vmatpush.msra.mxu0 %v2202
        %2268 = vmatpush.msra.mxu0 %v2201
        %2269 = vmatmul.f32.gmra.mxu0 %v2206
        %v2270 = vpop.f32.mrf.mxu0
        %v2271 = vadd.f32 0.0, %v2270
        %2272 = vmatmul.f32.gmra.mxu0 %v2209
        %v2273 = vpop.f32.mrf.mxu0
        %v2274 = vadd.f32 0.0, %v2273
        %2275 = vmatmul.f32.gmra.mxu0 %v2212
        %v2276 = vpop.f32.mrf.mxu0
        %v2277 = vadd.f32 0.0, %v2276
        %2278 = vmatmul.f32.gmra.mxu0 %v2215
        %v2279 = vpop.f32.mrf.mxu0
        %v2280 = vadd.f32 0.0, %v2279
        %2281 = vmatmul.f32.gmra.mxu0 %v2218
        %v2282 = vpop.f32.mrf.mxu0
        %v2283 = vadd.f32 0.0, %v2282
        %2284 = vmatmul.f32.gmra.mxu0 %v2221
        %v2285 = vpop.f32.mrf.mxu0
        %v2286 = vadd.f32 0.0, %v2285
        %2287 = vmatmul.f32.gmra.mxu0 %v2224
        %v2288 = vpop.f32.mrf.mxu0
        %v2289 = vadd.f32 0.0, %v2288
        %2290 = vmatmul.f32.gmra.mxu0 %v2227
        %v2291 = vpop.f32.mrf.mxu0
        %v2292 = vadd.f32 0.0, %v2291
        %2293 = vmatmul.f32.gmra.mxu0 %v2230
        %v2294 = vpop.f32.mrf.mxu0
        %v2295 = vadd.f32 0.0, %v2294
        %2296 = vmatmul.f32.gmra.mxu0 %v2233
        %v2297 = vpop.f32.mrf.mxu0
        %v2298 = vadd.f32 0.0, %v2297
        %2299 = vmatmul.f32.gmra.mxu0 %v2236
        %v2300 = vpop.f32.mrf.mxu0
        %v2301 = vadd.f32 0.0, %v2300
        %2302 = vmatmul.f32.gmra.mxu0 %v2239
        %v2303 = vpop.f32.mrf.mxu0
        %v2304 = vadd.f32 0.0, %v2303
        %2305 = vmatmul.f32.gmra.mxu0 %v2242
        %v2306 = vpop.f32.mrf.mxu0
        %v2307 = vadd.f32 0.0, %v2306
        %2308 = vmatmul.f32.gmra.mxu0 %v2245
        %v2309 = vpop.f32.mrf.mxu0
        %v2310 = vadd.f32 0.0, %v2309
        %2311 = vmatmul.f32.gmra.mxu0 %v2248
        %v2312 = vpop.f32.mrf.mxu0
        %v2313 = vadd.f32 0.0, %v2312
        %2314 = vmatmul.f32.gmra.mxu0 %v2251
        %v2315 = vpop.f32.mrf.mxu0
        %v2316 = vadd.f32 0.0, %v2315
        %2317 = vdwg.mxu0
        %v2318 = vadd.f32 %v1656, %v2271
        %v2319 = vadd.f32 %v1659, %v2274
        %v2320 = vadd.f32 %v1662, %v2277
        %v2321 = vadd.f32 %v1665, %v2280
        %v2322 = vadd.f32 %v1668, %v2283
        %v2323 = vadd.f32 %v1671, %v2286
        %v2324 = vadd.f32 %v1674, %v2289
        %v2325 = vadd.f32 %v1677, %v2292
        %v2326 = vadd.f32 %v1680, %v2295
        %v2327 = vadd.f32 %v1683, %v2298
        %v2328 = vadd.f32 %v1686, %v2301
        %v2329 = vadd.f32 %v1689, %v2304
        %v2330 = vadd.f32 %v1692, %v2307
        %v2331 = vadd.f32 %v1695, %v2310
        %v2332 = vadd.f32 %v1698, %v2313
        %v2333 = vadd.f32 %v1701, %v2316
        %2334 = vrot.lane.b32.xlu0 %v343, 32
        %v2335 = vpop.permute.xlu0 %2334
        %2336 = vrot.lane.b32.xlu0 %v346, 32
        %v2337 = vpop.permute.xlu0 %2336
        %2338 = vrot.lane.b32.xlu0 %v349, 32
        %v2339 = vpop.permute.xlu0 %2338
        %2340 = vrot.lane.b32.xlu0 %v352, 32
        %v2341 = vpop.permute.xlu0 %2340
        %2342 = vrot.lane.b32.xlu0 %v355, 32
        %v2343 = vpop.permute.xlu0 %2342
        %2344 = vrot.lane.b32.xlu0 %v358, 32
        %v2345 = vpop.permute.xlu0 %2344
        %2346 = vrot.lane.b32.xlu0 %v361, 32
        %v2347 = vpop.permute.xlu0 %2346
        %2348 = vrot.lane.b32.xlu0 %v364, 32
        %v2349 = vpop.permute.xlu0 %2348
        %2350 = vrot.lane.b32.xlu0 %v367, 32
        %v2351 = vpop.permute.xlu0 %2350
        %2352 = vrot.lane.b32.xlu0 %v370, 32
        %v2353 = vpop.permute.xlu0 %2352
        %2354 = vrot.lane.b32.xlu0 %v373, 32
        %v2355 = vpop.permute.xlu0 %2354
        %2356 = vrot.lane.b32.xlu0 %v376, 32
        %v2357 = vpop.permute.xlu0 %2356
        %2358 = vrot.lane.b32.xlu0 %v379, 32
        %v2359 = vpop.permute.xlu0 %2358
        %2360 = vrot.lane.b32.xlu0 %v382, 32
        %v2361 = vpop.permute.xlu0 %2360
        %2362 = vrot.lane.b32.xlu0 %v385, 32
        %v2363 = vpop.permute.xlu0 %2362
        %2364 = vrot.lane.b32.xlu0 %v388, 32
        %v2365 = vpop.permute.xlu0 %2364
        %2366 = vrot.lane.b32.xlu0 %v408, 32
        %v2367 = vpop.permute.xlu0 %2366
        %2368 = vrot.lane.b32.xlu0 %v411, 32
        %v2369 = vpop.permute.xlu0 %2368
        %2370 = vrot.lane.b32.xlu0 %v414, 32
        %v2371 = vpop.permute.xlu0 %2370
        %2372 = vrot.lane.b32.xlu0 %v417, 32
        %v2373 = vpop.permute.xlu0 %2372
        %2374 = vrot.lane.b32.xlu0 %v420, 32
        %v2375 = vpop.permute.xlu0 %2374
        %2376 = vrot.lane.b32.xlu0 %v423, 32
        %v2377 = vpop.permute.xlu0 %2376
        %2378 = vrot.lane.b32.xlu0 %v426, 32
        %v2379 = vpop.permute.xlu0 %2378
        %2380 = vrot.lane.b32.xlu0 %v429, 32
        %v2381 = vpop.permute.xlu0 %2380
        %2382 = vrot.lane.b32.xlu0 %v432, 32
        %v2383 = vpop.permute.xlu0 %2382
        %2384 = vrot.lane.b32.xlu0 %v435, 32
        %v2385 = vpop.permute.xlu0 %2384
        %2386 = vrot.lane.b32.xlu0 %v438, 32
        %v2387 = vpop.permute.xlu0 %2386
        %2388 = vrot.lane.b32.xlu0 %v441, 32
        %v2389 = vpop.permute.xlu0 %2388
        %2390 = vrot.lane.b32.xlu0 %v444, 32
        %v2391 = vpop.permute.xlu0 %2390
        %2392 = vrot.lane.b32.xlu0 %v447, 32
        %v2393 = vpop.permute.xlu0 %2392
        %2394 = vrot.lane.b32.xlu0 %v450, 32
        %v2395 = vpop.permute.xlu0 %2394
        %2396 = vrot.lane.b32.xlu0 %v453, 32
        %v2397 = vpop.permute.xlu0 %2396
        %v2398 = vsel %vm536, %v2335, 0
        %v2400 = vsel %vm536, %v2337, 0
        %v2402 = vsel %vm536, %v2339, 0
        %v2404 = vsel %vm536, %v2341, 0
        %v2406 = vsel %vm536, %v2343, 0
        %v2408 = vsel %vm536, %v2345, 0
        %v2410 = vsel %vm536, %v2347, 0
        %v2412 = vsel %vm536, %v2349, 0
        %v2414 = vsel %vm536, %v2351, 0
        %v2416 = vsel %vm536, %v2353, 0
        %v2418 = vsel %vm536, %v2355, 0
        %v2420 = vsel %vm536, %v2357, 0
        %v2422 = vsel %vm536, %v2359, 0
        %v2424 = vsel %vm536, %v2361, 0
        %v2426 = vsel %vm536, %v2363, 0
        %v2428 = vsel %vm536, %v2365, 0
        %v2430 = vsel %vm536, %v2367, 0
        %v2432 = vsel %vm536, %v2369, 0
        %v2434 = vsel %vm536, %v2371, 0
        %v2436 = vsel %vm536, %v2373, 0
        %v2438 = vsel %vm536, %v2375, 0
        %v2440 = vsel %vm536, %v2377, 0
        %v2442 = vsel %vm536, %v2379, 0
        %v2444 = vsel %vm536, %v2381, 0
        %v2446 = vsel %vm536, %v2383, 0
        %v2448 = vsel %vm536, %v2385, 0
        %v2450 = vsel %vm536, %v2387, 0
        %v2452 = vsel %vm536, %v2389, 0
        %v2454 = vsel %vm536, %v2391, 0
        %v2456 = vsel %vm536, %v2393, 0
        %v2458 = vsel %vm536, %v2395, 0
        %v2460 = vsel %vm536, %v2397, 0
        %2462 = vmatpush.xpose.msra.mxu0 %v2460
        %2463 = vmatpush.xpose.msra.mxu0 %v2458
        %2464 = vmatpush.xpose.msra.mxu0 %v2456
        %2465 = vmatpush.xpose.msra.mxu0 %v2454
        %2466 = vmatpush.xpose.msra.mxu0 %v2452
        %2467 = vmatpush.xpose.msra.mxu0 %v2450
        %2468 = vmatpush.xpose.msra.mxu0 %v2448
        %2469 = vmatpush.xpose.msra.mxu0 %v2446
        %2470 = vmatpush.xpose.msra.mxu0 %v2444
        %2471 = vmatpush.xpose.msra.mxu0 %v2442
        %2472 = vmatpush.xpose.msra.mxu0 %v2440
        %2473 = vmatpush.xpose.msra.mxu0 %v2438
        %2474 = vmatpush.xpose.msra.mxu0 %v2436
        %2475 = vmatpush.xpose.msra.mxu0 %v2434
        %2476 = vmatpush.xpose.msra.mxu0 %v2432
        %2477 = vmatpush.xpose.msra.mxu0 %v2430
        %2478 = vmatmul.f32.gmra.mxu0 %v2398
        %v2479 = vpop.f32.mrf.mxu0
        %v2480 = vadd.f32 0.0, %v2479
        %2481 = vmatmul.f32.gmra.mxu0 %v2400
        %v2482 = vpop.f32.mrf.mxu0
        %v2483 = vadd.f32 0.0, %v2482
        %2484 = vmatmul.f32.gmra.mxu0 %v2402
        %v2485 = vpop.f32.mrf.mxu0
        %v2486 = vadd.f32 0.0, %v2485
        %2487 = vmatmul.f32.gmra.mxu0 %v2404
        %v2488 = vpop.f32.mrf.mxu0
        %v2489 = vadd.f32 0.0, %v2488
        %2490 = vmatmul.f32.gmra.mxu0 %v2406
        %v2491 = vpop.f32.mrf.mxu0
        %v2492 = vadd.f32 0.0, %v2491
        %2493 = vmatmul.f32.gmra.mxu0 %v2408
        %v2494 = vpop.f32.mrf.mxu0
        %v2495 = vadd.f32 0.0, %v2494
        %2496 = vmatmul.f32.gmra.mxu0 %v2410
        %v2497 = vpop.f32.mrf.mxu0
        %v2498 = vadd.f32 0.0, %v2497
        %2499 = vmatmul.f32.gmra.mxu0 %v2412
        %v2500 = vpop.f32.mrf.mxu0
        %v2501 = vadd.f32 0.0, %v2500
        %2502 = vmatmul.f32.gmra.mxu0 %v2414
        %v2503 = vpop.f32.mrf.mxu0
        %v2504 = vadd.f32 0.0, %v2503
        %2505 = vmatmul.f32.gmra.mxu0 %v2416
        %v2506 = vpop.f32.mrf.mxu0
        %v2507 = vadd.f32 0.0, %v2506
        %2508 = vmatmul.f32.gmra.mxu0 %v2418
        %v2509 = vpop.f32.mrf.mxu0
        %v2510 = vadd.f32 0.0, %v2509
        %2511 = vmatmul.f32.gmra.mxu0 %v2420
        %v2512 = vpop.f32.mrf.mxu0
        %v2513 = vadd.f32 0.0, %v2512
        %2514 = vmatmul.f32.gmra.mxu0 %v2422
        %v2515 = vpop.f32.mrf.mxu0
        %v2516 = vadd.f32 0.0, %v2515
        %2517 = vmatmul.f32.gmra.mxu0 %v2424
        %v2518 = vpop.f32.mrf.mxu0
        %v2519 = vadd.f32 0.0, %v2518
        %2520 = vmatmul.f32.gmra.mxu0 %v2426
        %v2521 = vpop.f32.mrf.mxu0
        %v2522 = vadd.f32 0.0, %v2521
        %2523 = vmatmul.f32.gmra.mxu0 %v2428
        %v2524 = vpop.f32.mrf.mxu0
        %v2525 = vadd.f32 0.0, %v2524
        %2526 = vdwg.mxu0
        %v2527 = vmul.f32 %v2480, 0.088388346
        %v2528 = vmul.f32 %v2483, 0.088388346
        %v2529 = vmul.f32 %v2486, 0.088388346
        %v2530 = vmul.f32 %v2489, 0.088388346
        %v2531 = vmul.f32 %v2492, 0.088388346
        %v2532 = vmul.f32 %v2495, 0.088388346
        %v2533 = vmul.f32 %v2498, 0.088388346
        %v2534 = vmul.f32 %v2501, 0.088388346
        %v2535 = vmul.f32 %v2504, 0.088388346
        %v2536 = vmul.f32 %v2507, 0.088388346
        %v2537 = vmul.f32 %v2510, 0.088388346
        %v2538 = vmul.f32 %v2513, 0.088388346
        %v2539 = vmul.f32 %v2516, 0.088388346
        %v2540 = vmul.f32 %v2519, 0.088388346
        %v2541 = vmul.f32 %v2522, 0.088388346
        %v2542 = vmul.f32 %v2525, 0.088388346
        %v2543 = vfloor.f32 %v2527
        %v2544 = vfloor.f32 %v2528
        %v2545 = vfloor.f32 %v2529
        %v2546 = vfloor.f32 %v2530
        %v2547 = vfloor.f32 %v2531
        %v2548 = vfloor.f32 %v2532
        %v2549 = vfloor.f32 %v2533
        %v2550 = vfloor.f32 %v2534
        %v2551 = vfloor.f32 %v2535
        %v2552 = vfloor.f32 %v2536
        %v2553 = vfloor.f32 %v2537
        %v2554 = vfloor.f32 %v2538
        %v2555 = vfloor.f32 %v2539
        %v2556 = vfloor.f32 %v2540
        %v2557 = vfloor.f32 %v2541
        %v2558 = vfloor.f32 %v2542
        %v2559 = vadd.f32 %v2543, %v520
        %v2560 = vadd.f32 %v2544, %v521
        %v2561 = vadd.f32 %v2545, %v522
        %v2562 = vadd.f32 %v2546, %v523
        %v2563 = vadd.f32 %v2547, %v524
        %v2564 = vadd.f32 %v2548, %v525
        %v2565 = vadd.f32 %v2549, %v526
        %v2566 = vadd.f32 %v2550, %v527
        %v2567 = vadd.f32 %v2551, %v528
        %v2568 = vadd.f32 %v2552, %v529
        %v2569 = vadd.f32 %v2553, %v530
        %v2570 = vadd.f32 %v2554, %v531
        %v2571 = vadd.f32 %v2555, %v532
        %v2572 = vadd.f32 %v2556, %v533
        %v2573 = vadd.f32 %v2557, %v534
        %v2574 = vadd.f32 %v2558, %v535
        %2575 = vmax.xlane.f32.xlu0 %v2559
        %v2576 = vpop.xlane.xlu0 %2575
        %2577 = vmax.xlane.f32.xlu0 %v2560
        %v2578 = vpop.xlane.xlu0 %2577
        %2579 = vmax.xlane.f32.xlu0 %v2561
        %v2580 = vpop.xlane.xlu0 %2579
        %2581 = vmax.xlane.f32.xlu0 %v2562
        %v2582 = vpop.xlane.xlu0 %2581
        %2583 = vmax.xlane.f32.xlu0 %v2563
        %v2584 = vpop.xlane.xlu0 %2583
        %2585 = vmax.xlane.f32.xlu0 %v2564
        %v2586 = vpop.xlane.xlu0 %2585
        %2587 = vmax.xlane.f32.xlu0 %v2565
        %v2588 = vpop.xlane.xlu0 %2587
        %2589 = vmax.xlane.f32.xlu0 %v2566
        %v2590 = vpop.xlane.xlu0 %2589
        %2591 = vmax.xlane.f32.xlu0 %v2567
        %v2592 = vpop.xlane.xlu0 %2591
        %2593 = vmax.xlane.f32.xlu0 %v2568
        %v2594 = vpop.xlane.xlu0 %2593
        %2595 = vmax.xlane.f32.xlu0 %v2569
        %v2596 = vpop.xlane.xlu0 %2595
        %2597 = vmax.xlane.f32.xlu0 %v2570
        %v2598 = vpop.xlane.xlu0 %2597
        %2599 = vmax.xlane.f32.xlu0 %v2571
        %v2600 = vpop.xlane.xlu0 %2599
        %2601 = vmax.xlane.f32.xlu0 %v2572
        %v2602 = vpop.xlane.xlu0 %2601
        %2603 = vmax.xlane.f32.xlu0 %v2573
        %v2604 = vpop.xlane.xlu0 %2603
        %2605 = vmax.xlane.f32.xlu0 %v2574
        %v2606 = vpop.xlane.xlu0 %2605
        %v2607 = vsub.f32 %v2559, %v2576
        %v2608 = vsub.f32 %v2560, %v2578
        %v2609 = vsub.f32 %v2561, %v2580
        %v2610 = vsub.f32 %v2562, %v2582
        %v2611 = vsub.f32 %v2563, %v2584
        %v2612 = vsub.f32 %v2564, %v2586
        %v2613 = vsub.f32 %v2565, %v2588
        %v2614 = vsub.f32 %v2566, %v2590
        %v2615 = vsub.f32 %v2567, %v2592
        %v2616 = vsub.f32 %v2568, %v2594
        %v2617 = vsub.f32 %v2569, %v2596
        %v2618 = vsub.f32 %v2570, %v2598
        %v2619 = vsub.f32 %v2571, %v2600
        %v2620 = vsub.f32 %v2572, %v2602
        %v2621 = vsub.f32 %v2573, %v2604
        %v2622 = vsub.f32 %v2574, %v2606
        %v2623 = vmul.f32 %v2607, 1.442695
        %v2624 = vpow.pop %v2623
        %v2625 = vmul.f32 %v2608, 1.442695
        %v2626 = vpow.pop %v2625
        %v2627 = vmul.f32 %v2609, 1.442695
        %v2628 = vpow.pop %v2627
        %v2629 = vmul.f32 %v2610, 1.442695
        %v2630 = vpow.pop %v2629
        %v2631 = vmul.f32 %v2611, 1.442695
        %v2632 = vpow.pop %v2631
        %v2633 = vmul.f32 %v2612, 1.442695
        %v2634 = vpow.pop %v2633
        %v2635 = vmul.f32 %v2613, 1.442695
        %v2636 = vpow.pop %v2635
        %v2637 = vmul.f32 %v2614, 1.442695
        %v2638 = vpow.pop %v2637
        %v2639 = vmul.f32 %v2615, 1.442695
        %v2640 = vpow.pop %v2639
        %v2641 = vmul.f32 %v2616, 1.442695
        %v2642 = vpow.pop %v2641
        %v2643 = vmul.f32 %v2617, 1.442695
        %v2644 = vpow.pop %v2643
        %v2645 = vmul.f32 %v2618, 1.442695
        %v2646 = vpow.pop %v2645
        %v2647 = vmul.f32 %v2619, 1.442695
        %v2648 = vpow.pop %v2647
        %v2649 = vmul.f32 %v2620, 1.442695
        %v2650 = vpow.pop %v2649
        %v2651 = vmul.f32 %v2621, 1.442695
        %v2652 = vpow.pop %v2651
        %v2653 = vmul.f32 %v2622, 1.442695
        %v2654 = vpow.pop %v2653
        %2655 = vadd.xlane.f32.xlu0 %v2624
        %v2656 = vpop.xlane.xlu0 %2655
        %2657 = vadd.xlane.f32.xlu0 %v2626
        %v2658 = vpop.xlane.xlu0 %2657
        %2659 = vadd.xlane.f32.xlu0 %v2628
        %v2660 = vpop.xlane.xlu0 %2659
        %2661 = vadd.xlane.f32.xlu0 %v2630
        %v2662 = vpop.xlane.xlu0 %2661
        %2663 = vadd.xlane.f32.xlu0 %v2632
        %v2664 = vpop.xlane.xlu0 %2663
        %2665 = vadd.xlane.f32.xlu0 %v2634
        %v2666 = vpop.xlane.xlu0 %2665
        %2667 = vadd.xlane.f32.xlu0 %v2636
        %v2668 = vpop.xlane.xlu0 %2667
        %2669 = vadd.xlane.f32.xlu0 %v2638
        %v2670 = vpop.xlane.xlu0 %2669
        %2671 = vadd.xlane.f32.xlu0 %v2640
        %v2672 = vpop.xlane.xlu0 %2671
        %2673 = vadd.xlane.f32.xlu0 %v2642
        %v2674 = vpop.xlane.xlu0 %2673
        %2675 = vadd.xlane.f32.xlu0 %v2644
        %v2676 = vpop.xlane.xlu0 %2675
        %2677 = vadd.xlane.f32.xlu0 %v2646
        %v2678 = vpop.xlane.xlu0 %2677
        %2679 = vadd.xlane.f32.xlu0 %v2648
        %v2680 = vpop.xlane.xlu0 %2679
        %2681 = vadd.xlane.f32.xlu0 %v2650
        %v2682 = vpop.xlane.xlu0 %2681
        %2683 = vadd.xlane.f32.xlu0 %v2652
        %v2684 = vpop.xlane.xlu0 %2683
        %2685 = vadd.xlane.f32.xlu0 %v2654
        %v2686 = vpop.xlane.xlu0 %2685
        %v2687 = vrcp.pop %v2656
        %v2688 = vrcp.pop %v2658
        %v2689 = vrcp.pop %v2660
        %v2690 = vrcp.pop %v2662
        %v2691 = vrcp.pop %v2664
        %v2692 = vrcp.pop %v2666
        %v2693 = vrcp.pop %v2668
        %v2694 = vrcp.pop %v2670
        %v2695 = vrcp.pop %v2672
        %v2696 = vrcp.pop %v2674
        %v2697 = vrcp.pop %v2676
        %v2698 = vrcp.pop %v2678
        %v2699 = vrcp.pop %v2680
        %v2700 = vrcp.pop %v2682
        %v2701 = vrcp.pop %v2684
        %v2702 = vrcp.pop %v2686
        %2703 = vrot.lane.b32.xlu0 %v473, 32
        %v2704 = vpop.permute.xlu0 %2703
        %2705 = vrot.lane.b32.xlu0 %v476, 32
        %v2706 = vpop.permute.xlu0 %2705
        %2707 = vrot.lane.b32.xlu0 %v479, 32
        %v2708 = vpop.permute.xlu0 %2707
        %2709 = vrot.lane.b32.xlu0 %v482, 32
        %v2710 = vpop.permute.xlu0 %2709
        %2711 = vrot.lane.b32.xlu0 %v485, 32
        %v2712 = vpop.permute.xlu0 %2711
        %2713 = vrot.lane.b32.xlu0 %v488, 32
        %v2714 = vpop.permute.xlu0 %2713
        %2715 = vrot.lane.b32.xlu0 %v491, 32
        %v2716 = vpop.permute.xlu0 %2715
        %2717 = vrot.lane.b32.xlu0 %v494, 32
        %v2718 = vpop.permute.xlu0 %2717
        %2719 = vrot.lane.b32.xlu0 %v497, 32
        %v2720 = vpop.permute.xlu0 %2719
        %2721 = vrot.lane.b32.xlu0 %v500, 32
        %v2722 = vpop.permute.xlu0 %2721
        %2723 = vrot.lane.b32.xlu0 %v503, 32
        %v2724 = vpop.permute.xlu0 %2723
        %2725 = vrot.lane.b32.xlu0 %v506, 32
        %v2726 = vpop.permute.xlu0 %2725
        %2727 = vrot.lane.b32.xlu0 %v509, 32
        %v2728 = vpop.permute.xlu0 %2727
        %2729 = vrot.lane.b32.xlu0 %v512, 32
        %v2730 = vpop.permute.xlu0 %2729
        %2731 = vrot.lane.b32.xlu0 %v515, 32
        %v2732 = vpop.permute.xlu0 %2731
        %2733 = vrot.lane.b32.xlu0 %v518, 32
        %v2734 = vpop.permute.xlu0 %2733
        %2751 = vmatpush.msra.mxu0 %v2734
        %2752 = vmatpush.msra.mxu0 %v2732
        %2753 = vmatpush.msra.mxu0 %v2730
        %2754 = vmatpush.msra.mxu0 %v2728
        %2755 = vmatpush.msra.mxu0 %v2726
        %2756 = vmatpush.msra.mxu0 %v2724
        %2757 = vmatpush.msra.mxu0 %v2722
        %2758 = vmatpush.msra.mxu0 %v2720
        %2759 = vmatpush.msra.mxu0 %v2718
        %2760 = vmatpush.msra.mxu0 %v2716
        %2761 = vmatpush.msra.mxu0 %v2714
        %2762 = vmatpush.msra.mxu0 %v2712
        %2763 = vmatpush.msra.mxu0 %v2710
        %2764 = vmatpush.msra.mxu0 %v2708
        %2765 = vmatpush.msra.mxu0 %v2706
        %2766 = vmatpush.msra.mxu0 %v2704
        %2767 = vmatmul.f32.gmra.mxu0 %v2624
        %v2768 = vpop.f32.mrf.mxu0
        %v2769 = vadd.f32 0.0, %v2768
        %2770 = vmatmul.f32.gmra.mxu0 %v2626
        %v2771 = vpop.f32.mrf.mxu0
        %v2772 = vadd.f32 0.0, %v2771
        %2773 = vmatmul.f32.gmra.mxu0 %v2628
        %v2774 = vpop.f32.mrf.mxu0
        %v2775 = vadd.f32 0.0, %v2774
        %2776 = vmatmul.f32.gmra.mxu0 %v2630
        %v2777 = vpop.f32.mrf.mxu0
        %v2778 = vadd.f32 0.0, %v2777
        %2779 = vmatmul.f32.gmra.mxu0 %v2632
        %v2780 = vpop.f32.mrf.mxu0
        %v2781 = vadd.f32 0.0, %v2780
        %2782 = vmatmul.f32.gmra.mxu0 %v2634
        %v2783 = vpop.f32.mrf.mxu0
        %v2784 = vadd.f32 0.0, %v2783
        %2785 = vmatmul.f32.gmra.mxu0 %v2636
        %v2786 = vpop.f32.mrf.mxu0
        %v2787 = vadd.f32 0.0, %v2786
        %2788 = vmatmul.f32.gmra.mxu0 %v2638
        %v2789 = vpop.f32.mrf.mxu0
        %v2790 = vadd.f32 0.0, %v2789
        %2791 = vmatmul.f32.gmra.mxu0 %v2640
        %v2792 = vpop.f32.mrf.mxu0
        %v2793 = vadd.f32 0.0, %v2792
        %2794 = vmatmul.f32.gmra.mxu0 %v2642
        %v2795 = vpop.f32.mrf.mxu0
        %v2796 = vadd.f32 0.0, %v2795
        %2797 = vmatmul.f32.gmra.mxu0 %v2644
        %v2798 = vpop.f32.mrf.mxu0
        %v2799 = vadd.f32 0.0, %v2798
        %2800 = vmatmul.f32.gmra.mxu0 %v2646
        %v2801 = vpop.f32.mrf.mxu0
        %v2802 = vadd.f32 0.0, %v2801
        %2803 = vmatmul.f32.gmra.mxu0 %v2648
        %v2804 = vpop.f32.mrf.mxu0
        %v2805 = vadd.f32 0.0, %v2804
        %2806 = vmatmul.f32.gmra.mxu0 %v2650
        %v2807 = vpop.f32.mrf.mxu0
        %v2808 = vadd.f32 0.0, %v2807
        %2809 = vmatmul.f32.gmra.mxu0 %v2652
        %v2810 = vpop.f32.mrf.mxu0
        %v2811 = vadd.f32 0.0, %v2810
        %2812 = vmatmul.f32.gmra.mxu0 %v2654
        %v2813 = vpop.f32.mrf.mxu0
        %v2814 = vadd.f32 0.0, %v2813
        %2815 = vdwg.mxu0
        %v2816 = vmul.f32 %v2769, %v2687
        %v2817 = vmul.f32 %v2772, %v2688
        %v2818 = vmul.f32 %v2775, %v2689
        %v2819 = vmul.f32 %v2778, %v2690
        %v2820 = vmul.f32 %v2781, %v2691
        %v2821 = vmul.f32 %v2784, %v2692
        %v2822 = vmul.f32 %v2787, %v2693
        %v2823 = vmul.f32 %v2790, %v2694
        %v2824 = vmul.f32 %v2793, %v2695
        %v2825 = vmul.f32 %v2796, %v2696
        %v2826 = vmul.f32 %v2799, %v2697
        %v2827 = vmul.f32 %v2802, %v2698
        %v2828 = vmul.f32 %v2805, %v2699
        %v2829 = vmul.f32 %v2808, %v2700
        %v2830 = vmul.f32 %v2811, %v2701
        %v2831 = vmul.f32 %v2814, %v2702
        %v2832 = vld [vmem:[%s4 + $0x60] sm:$0xff]
        %v2833 = vld [vmem:[%s4 + $0x68] sm:$0xff]
        %v2834 = vld [vmem:[%s4 + $0x70] sm:$0xff]
        %v2835 = vld [vmem:[%s4 + $0x78] sm:$0xff]
        %v2837 = vsel %vm536, %v2816, 0
        %v2840 = vsel %vm536, %v2817, 0
        %v2843 = vsel %vm536, %v2818, 0
        %v2846 = vsel %vm536, %v2819, 0
        %v2849 = vsel %vm536, %v2820, 0
        %v2852 = vsel %vm536, %v2821, 0
        %v2855 = vsel %vm536, %v2822, 0
        %v2858 = vsel %vm536, %v2823, 0
        %v2861 = vsel %vm536, %v2824, 0
        %v2864 = vsel %vm536, %v2825, 0
        %v2867 = vsel %vm536, %v2826, 0
        %v2870 = vsel %vm536, %v2827, 0
        %v2873 = vsel %vm536, %v2828, 0
        %v2876 = vsel %vm536, %v2829, 0
        %v2879 = vsel %vm536, %v2830, 0
        %v2882 = vsel %vm536, %v2831, 0
        %2884 = vmatpush.msra.mxu0 0.0
        %2885 = vmatpush.msra.mxu0 0.0
        %2886 = vmatpush.msra.mxu0 0.0
        %2887 = vmatpush.msra.mxu0 0.0
        %2888 = vmatpush.msra.mxu0 0.0
        %2889 = vmatpush.msra.mxu0 0.0
        %2890 = vmatpush.msra.mxu0 0.0
        %2891 = vmatpush.msra.mxu0 0.0
        %2892 = vmatpush.msra.mxu0 0.0
        %2893 = vmatpush.msra.mxu0 0.0
        %2894 = vmatpush.msra.mxu0 0.0
        %2895 = vmatpush.msra.mxu0 0.0
        %2896 = vmatpush.msra.mxu0 %v2835
        %2897 = vmatpush.msra.mxu0 %v2834
        %2898 = vmatpush.msra.mxu0 %v2833
        %2899 = vmatpush.msra.mxu0 %v2832
        %2900 = vmatmul.f32.gmra.mxu0 %v2837
        %v2901 = vpop.f32.mrf.mxu0
        %v2902 = vadd.f32 0.0, %v2901
        %2903 = vmatmul.f32.gmra.mxu0 %v2840
        %v2904 = vpop.f32.mrf.mxu0
        %v2905 = vadd.f32 0.0, %v2904
        %2906 = vmatmul.f32.gmra.mxu0 %v2843
        %v2907 = vpop.f32.mrf.mxu0
        %v2908 = vadd.f32 0.0, %v2907
        %2909 = vmatmul.f32.gmra.mxu0 %v2846
        %v2910 = vpop.f32.mrf.mxu0
        %v2911 = vadd.f32 0.0, %v2910
        %2912 = vmatmul.f32.gmra.mxu0 %v2849
        %v2913 = vpop.f32.mrf.mxu0
        %v2914 = vadd.f32 0.0, %v2913
        %2915 = vmatmul.f32.gmra.mxu0 %v2852
        %v2916 = vpop.f32.mrf.mxu0
        %v2917 = vadd.f32 0.0, %v2916
        %2918 = vmatmul.f32.gmra.mxu0 %v2855
        %v2919 = vpop.f32.mrf.mxu0
        %v2920 = vadd.f32 0.0, %v2919
        %2921 = vmatmul.f32.gmra.mxu0 %v2858
        %v2922 = vpop.f32.mrf.mxu0
        %v2923 = vadd.f32 0.0, %v2922
        %2924 = vmatmul.f32.gmra.mxu0 %v2861
        %v2925 = vpop.f32.mrf.mxu0
        %v2926 = vadd.f32 0.0, %v2925
        %2927 = vmatmul.f32.gmra.mxu0 %v2864
        %v2928 = vpop.f32.mrf.mxu0
        %v2929 = vadd.f32 0.0, %v2928
        %2930 = vmatmul.f32.gmra.mxu0 %v2867
        %v2931 = vpop.f32.mrf.mxu0
        %v2932 = vadd.f32 0.0, %v2931
        %2933 = vmatmul.f32.gmra.mxu0 %v2870
        %v2934 = vpop.f32.mrf.mxu0
        %v2935 = vadd.f32 0.0, %v2934
        %2936 = vmatmul.f32.gmra.mxu0 %v2873
        %v2937 = vpop.f32.mrf.mxu0
        %v2938 = vadd.f32 0.0, %v2937
        %2939 = vmatmul.f32.gmra.mxu0 %v2876
        %v2940 = vpop.f32.mrf.mxu0
        %v2941 = vadd.f32 0.0, %v2940
        %2942 = vmatmul.f32.gmra.mxu0 %v2879
        %v2943 = vpop.f32.mrf.mxu0
        %v2944 = vadd.f32 0.0, %v2943
        %2945 = vmatmul.f32.gmra.mxu0 %v2882
        %v2946 = vpop.f32.mrf.mxu0
        %v2947 = vadd.f32 0.0, %v2946
        %2948 = vdwg.mxu0
        %v2949 = vadd.f32 %v2318, %v2902
        %v2950 = vadd.f32 %v2319, %v2905
        %v2951 = vadd.f32 %v2320, %v2908
        %v2952 = vadd.f32 %v2321, %v2911
        %v2953 = vadd.f32 %v2322, %v2914
        %v2954 = vadd.f32 %v2323, %v2917
        %v2955 = vadd.f32 %v2324, %v2920
        %v2956 = vadd.f32 %v2325, %v2923
        %v2957 = vadd.f32 %v2326, %v2926
        %v2958 = vadd.f32 %v2327, %v2929
        %v2959 = vadd.f32 %v2328, %v2932
        %v2960 = vadd.f32 %v2329, %v2935
        %v2961 = vadd.f32 %v2330, %v2938
        %v2962 = vadd.f32 %v2331, %v2941
        %v2963 = vadd.f32 %v2332, %v2944
        %v2964 = vadd.f32 %v2333, %v2947
        %v2965 = vld [vmem:[%s5] sm:$0x1]
        %v2967 = vperm.slane %v2965, 0
        %v2969 = vadd.f32 %v2949, %v2967
        %v2970 = vadd.f32 %v2950, %v2967
        %v2971 = vadd.f32 %v2951, %v2967
        %v2972 = vadd.f32 %v2952, %v2967
        %v2973 = vadd.f32 %v2953, %v2967
        %v2974 = vadd.f32 %v2954, %v2967
        %v2975 = vadd.f32 %v2955, %v2967
        %v2976 = vadd.f32 %v2956, %v2967
        %v2977 = vadd.f32 %v2957, %v2967
        %v2978 = vadd.f32 %v2958, %v2967
        %v2979 = vadd.f32 %v2959, %v2967
        %v2980 = vadd.f32 %v2960, %v2967
        %v2981 = vadd.f32 %v2961, %v2967
        %v2982 = vadd.f32 %v2962, %v2967
        %v2983 = vadd.f32 %v2963, %v2967
        %v2984 = vadd.f32 %v2964, %v2967
        %2985 = vst [vmem:[%s245] sm:$0xff] %v2969
        %2986 = vst [vmem:[%s245 + $0x8] sm:$0xff] %v2970
        %2987 = vst [vmem:[%s245 + $0x10] sm:$0xff] %v2971
        %2988 = vst [vmem:[%s245 + $0x18] sm:$0xff] %v2972
        %2989 = vst [vmem:[%s245 + $0x20] sm:$0xff] %v2973
        %2990 = vst [vmem:[%s245 + $0x28] sm:$0xff] %v2974
        %2991 = vst [vmem:[%s245 + $0x30] sm:$0xff] %v2975
        %2992 = vst [vmem:[%s245 + $0x38] sm:$0xff] %v2976
        %2993 = vst [vmem:[%s245 + $0x40] sm:$0xff] %v2977
        %2994 = vst [vmem:[%s245 + $0x48] sm:$0xff] %v2978
        %2995 = vst [vmem:[%s245 + $0x50] sm:$0xff] %v2979
        %2996 = vst [vmem:[%s245 + $0x58] sm:$0xff] %v2980
        %2997 = vst [vmem:[%s245 + $0x60] sm:$0xff] %v2981
        %2998 = vst [vmem:[%s245 + $0x68] sm:$0xff] %v2982
        %2999 = vst [vmem:[%s245 + $0x70] sm:$0xff] %v2983
        %3000 = vst [vmem:[%s245 + $0x78] sm:$0xff] %v2984
        %s3001 = sand.u32 %s159, 1
        %s3002 = scalar_lea.sflag [#allocation3], %s3001
        %s3003 = sand.u32 %s159, 1
        %s3004 = smul.addr %s3003, 128
        %s3005 = scalar_lea.vmem [#allocation2], %s3004
        // Predicated region
        $region45: #{mha_forward.1} parent=43 // pred_check
          %p3006 = pneg %p169
        $region46: #{mha_forward.1} parent=43 // pred_check_branch
          %3008 = sbr.rel (%p3006) target = $region48
        $region47: #{mha_forward.1} parent=43 // pred_region
          %s3009 = smul.u32 16, %s20
          %3011 = vsyncadd %s3002, 0
          %s3012 = smul.addr %s3009, 8
          %s3013 = scalar_lea.hbm %s6, %s3012
          %s3014 = sshll.u32 %s3005, 4
          %s3015 = int_to_ptr.vmem [resolvable:$true] %s3014
          %s3016 = sshll.u32 %s3013, 4
          %s3017 = int_to_ptr.hbm [resolvable:$true] %s3016
          %3022 = dma.vmem_to_hbm [thread:$0]  %s3015, 2048, %s3017, %s3002, 128, 128, 8
        $region48: #{mha_forward.1} parent=43 // pred_fallthru
          _
      $region44: #{mha_forward.1} parent=5 // pred_fallthru
        _
      %p3023 = scmp.le.s32.totalorder 2, %s15
      // Predicated region
      $region49: #{mha_forward.1} parent=5 // pred_check
        %p3024 = pneg %p3023
      $region50: #{mha_forward.1} parent=5 // pred_check_branch
        %3026 = sbr.rel (%p3024) target = $region52
      $region51: #{mha_forward.1} parent=5 // pred_region
        %s3027 = ssub.s32 %s15, 2
        // Predicated region
        $region53: #{mha_forward.1} parent=51 // pred_check
          %p3028 = pneg %p175
        $region54: #{mha_forward.1} parent=51 // pred_check_branch
          %3030 = sbr.rel (%p3028) target = $region56
        $region55: #{mha_forward.1} parent=51 // pred_region
          %s3031 = sand.u32 %s160, 1
          %s3032 = scalar_lea.sflag [#allocation3], %s3031
          %s3033 = sand.u32 %s160, 1
          %s3034 = smul.addr %s3033, 128
          %s3035 = scalar_lea.vmem [#allocation2], %s3034
          %3037 = dma.done %s3032, 2048
        $region56: #{mha_forward.1} parent=51 // pred_fallthru
          _
      $region52: #{mha_forward.1} parent=5 // pred_fallthru
        _
    $region6: #{mha_forward.1} parent=1 // loop_footer
      %s19 = sadd.s32 1, %s15
    $region7: #{mha_forward.1} parent=1 // loop_footer_branch
      %14 = sbr.rel target = $region3
    $region8: #{mha_forward.1} parent=1 // loop_exit
      _
    %3038 = vsyncpa [#allocation3], 1
    %s3039 = scalar_lea.sflag [#allocation3], 1
    %3040 = vsyncpa %s3039, 1

</llo_original>
